<compile_context>
chip_gen: v7x
topology: tpu7x:2x2x1
jax: 0.10.0
libtpu: 0.0.40
codegen_flags: <defaults>
</compile_context>

<pallas_src>
import functools

import jax
import jax.numpy as jnp
from jax.experimental import pallas as pl
from jax.experimental.pallas import tpu as pltpu


def _round_up(x, m):
    return pl.cdiv(x, m) * m


def _cnn_text_kernel(tok_ref, emb_hbm, w_ref, b_ref, out_ref,
                     gbuf, sems, pool, *, tb, seq_len):
    # tok_ref : SMEM (B_pad, L) int32     scalar-prefetched token ids
    # emb_hbm : HBM  (V, D_pad) f32       embedding table (raw ref, manual DMA)
    # w_ref   : VMEM (D_pad, C_pad) f32   fc1 weight, pre-transposed + padded
    # b_ref   : VMEM (1, C_pad) f32       fc1 bias, lane-padded
    # out_ref : VMEM (tb, C_pad) f32      logits tile
    # gbuf    : VMEM (2, tb, D_pad) f32   double-buffered gathered rows
    # sems    : DMA  (2, tb)              one semaphore per in-flight row copy
    # pool    : VMEM (tb, D_pad) f32      running max over the sequence
    i = pl.program_id(0)
    row0 = i * tb

    def start_fetch(l, slot):
        # One row-gather DMA per batch element of this tile -> up to 2*tb
        # outstanding row copies across the two slots (review: 8-16).
        for b in range(tb):
            t = tok_ref[row0 + b, l]
            pltpu.make_async_copy(
                emb_hbm.at[pl.ds(t, 1), :],
                gbuf.at[slot, pl.ds(b, 1), :],
                sems.at[slot, b],
            ).start()

    def wait_fetch(slot):
        for b in range(tb):
            pltpu.make_async_copy(
                emb_hbm.at[pl.ds(0, 1), :],          # shape-only src for wait
                gbuf.at[slot, pl.ds(b, 1), :],
                sems.at[slot, b],
            ).wait()

    pool[...] = jnp.full_like(pool, -jnp.inf)
    start_fetch(0, 0)

    @pl.loop(0, seq_len)
    def _(l):
        slot = l % 2
        wait_fetch(slot)

        # Prefetch the next sequence position into the other buffer (that
        # buffer was fully consumed at the previous iteration) while we reduce
        # this one -- same double-buffer pattern as the paged-attention ref.
        @pl.when(l + 1 < seq_len)
        def _():
            start_fetch(l + 1, 1 - slot)

        pool[...] = jnp.maximum(pool[...], gbuf[slot])

    # Finalize once per batch tile: (tb, D) @ (D, C) on the MXU with f32
    # accumulation, bias add, lane-dense (C_pad multiple of 128) store.
    y = jnp.dot(pool[...], w_ref[...], preferred_element_type=jnp.float32)
    out_ref[...] = y + b_ref[...]


def prepare_cnn_text_params(embed_weight, fc_weight, fc_bias):
    """One-time host-side prep (done outside the per-call jit, per review):
    lane-pad the embedding table to D_pad, pre-transpose/pad the classifier."""
    V, D = embed_weight.shape
    C = fc_weight.shape[0]
    D_pad = _round_up(D, 128)
    C_pad = _round_up(C, 128)
    emb = jnp.zeros((V, D_pad), jnp.float32).at[:, :D].set(
        embed_weight.astype(jnp.float32))
    w_t = jnp.zeros((D_pad, C_pad), jnp.float32).at[:D, :C].set(
        fc_weight.astype(jnp.float32).T)
    b_p = jnp.zeros((1, C_pad), jnp.float32).at[:, :C].set(
        fc_bias.astype(jnp.float32)[None, :])
    return emb, w_t, b_p


@functools.partial(jax.jit, static_argnames=("num_classes", "tb"))
def cnn_text_forward(token_ids, emb_table, w_t, b_p, *, num_classes, tb=8):
    """token_ids: (B, L) int; emb_table/w_t/b_p from prepare_cnn_text_params."""
    B, L = token_ids.shape
    _, D_pad = emb_table.shape
    C_pad = w_t.shape[1]

    # tb = batch-tile rows (multiple of 8 for the sublane constraint).  2*tb is
    # also the outstanding-row-DMA count, so keep it modest (8-16); raise it
    # for large B to get fewer grid steps / a fuller finalize matmul.
    assert tb % 8 == 0
    B_pad = _round_up(B, tb)

    tok = token_ids.astype(jnp.int32)
    if B_pad != B:
        # Pad batch rows with token 0 (any valid row); their logits are
        # sliced away below.  Only this tiny array is ever padded.
        tok = jnp.pad(tok, ((0, B_pad - B), (0, 0)))

    kernel = functools.partial(_cnn_text_kernel, tb=tb, seq_len=L)

    out = pl.pallas_call(
        kernel,
        out_shape=jax.ShapeDtypeStruct((B_pad, C_pad), jnp.float32),
        grid_spec=pltpu.PrefetchScalarGridSpec(
            num_scalar_prefetch=1,                         # token ids -> SMEM
            grid=(B_pad // tb,),
            in_specs=[
                pl.BlockSpec(memory_space=pl.ANY),          # emb table in HBM
                pl.BlockSpec((D_pad, C_pad), lambda i, tok: (0, 0)),
                pl.BlockSpec((1, C_pad), lambda i, tok: (0, 0)),
            ],
            out_specs=pl.BlockSpec((tb, C_pad), lambda i, tok: (i, 0)),
            scratch_shapes=[
                pltpu.VMEM((2, tb, D_pad), jnp.float32),    # gather dbl-buffer
                pltpu.SemaphoreType.DMA((2, tb)),
                pltpu.VMEM((tb, D_pad), jnp.float32),       # running max
            ],
        ),
        compiler_params=pltpu.CompilerParams(
            # Batch tiles are independent -> parallel (megacore sharding on
            # v7x).  The sequence reduction is an in-kernel loop, so there is
            # no reduction grid axis to order.
            dimension_semantics=("parallel",),
        ),
    )(tok, emb_table, w_t, b_p)

    return out[:B, :num_classes]


if __name__ == "__main__":
    # Hyperparameters implied by __init__: V = vocab_num, D = embed_dim,
    # C = class_num.  Small deterministic shapes.
    B, L = 2, 8
    V, D, C = 100, 32, 4

    key = jax.random.PRNGKey(0)
    k_emb, k_w, k_b, k_ids = jax.random.split(key, 4)

    embed_weight = jax.random.normal(k_emb, (V, D), dtype=jnp.float32) * 0.1
    fc_weight = jax.random.normal(k_w, (C, D), dtype=jnp.float32) * 0.1
    fc_bias = jax.random.normal(k_b, (C,), dtype=jnp.float32) * 0.1
    token_ids = jax.random.randint(k_ids, (B, L), minval=0, maxval=V,
                                   dtype=jnp.int32)

    emb_table, w_t, b_p = prepare_cnn_text_params(embed_weight, fc_weight, fc_bias)
    out = cnn_text_forward(token_ids, emb_table, w_t, b_p, num_classes=C)
    out = jax.block_until_ready(out)

    # Reference in plain JAX (same math as the PyTorch forward, full f32).
    emb_ref = jnp.take(embed_weight, token_ids, axis=0)        # (B, L, D)
    pooled_ref = jnp.max(emb_ref, axis=1)                      # (B, D)
    ref = pooled_ref @ fc_weight.T + fc_bias                   # (B, C)

    assert out.shape == (B, C)
    # Embeddings/pooling are exact f32 now; tolerance only covers MXU matmul
    # rounding.
    assert jnp.allclose(out, ref, atol=2e-3, rtol=2e-3), (out, ref)

    print("KERNEL_OK")
</pallas_src>

<mosaic_0001>
module attributes {stable_mosaic.version = 11 : i64} {
  func.func @_cnn_text_kernel(%arg0: i32, %arg1: memref<8x8xi32, #tpu.memory_space<smem>>, %arg2: memref<100x128xf32, #tpu.memory_space<any>>, %arg3: memref<128x128xf32, #tpu.memory_space<vmem>>, %arg4: memref<1x128xf32, #tpu.memory_space<vmem>>, %arg5: memref<8x128xf32, #tpu.memory_space<vmem>>, %arg6: memref<2x8x128xf32, #tpu.memory_space<vmem>>, %arg7: memref<2x8x!tpu.dma_semaphore, #tpu.memory_space<semaphore_mem>>, %arg8: memref<8x128xf32, #tpu.memory_space<vmem>>) attributes {dimension_semantics = [#tpu.dimension_semantics<parallel>], iteration_bounds = array<i64: 1>, scalar_prefetch = 1 : i64, scratch_operands = 3 : i64, tpu.core_type = #tpu.core_type<tc>, window_params = [{}, {pipeline_mode = #tpu.pipeline_mode<synchronous>, transform_indices = @transform_1, window_bounds = array<i64: 128, 128>}, {pipeline_mode = #tpu.pipeline_mode<synchronous>, transform_indices = @transform_2, window_bounds = array<i64: 1, 128>}, {transform_indices = @transform_3, window_bounds = array<i64: 8, 128>}]} {
    %c8_i32 = arith.constant 8 : i32
    %0 = arith.muli %arg0, %c8_i32 : i32
    %cst = arith.constant 0xFF800000 : f32
    %1 = vector.broadcast %cst : f32 to vector<8x128xf32>
    %c0 = arith.constant 0 : index
    %c0_0 = arith.constant 0 : index
    %2 = vector.load %arg8[%c0, %c0_0] : memref<8x128xf32, #tpu.memory_space<vmem>>, vector<8x128xf32>
    tpu.vector_store %arg8[%c0, %c0_0], %1 {strides = array<i32>} : memref<8x128xf32, #tpu.memory_space<vmem>>, vector<8x128xf32>,
    %c0_i32 = arith.constant 0 : i32
    %3 = arith.addi %0, %c0_i32 : i32
    %4 = arith.index_cast %3 : i32 to index
    %c0_1 = arith.constant 0 : index
    %5 = memref.load %arg1[%4, %c0_1] : memref<8x8xi32, #tpu.memory_space<smem>>
    %c0_i32_2 = arith.constant 0 : i32
    %c0_i32_3 = arith.constant 0 : i32
    %c0_i32_4 = arith.constant 0 : i32
    %c0_i32_5 = arith.constant 0 : i32
    %6 = tpu.memref_slice %arg2[%5, %c0_i32_5] : memref<100x128xf32, #tpu.memory_space<any>> -> memref<1x128xf32, #tpu.memory_space<any>>
    %c0_i32_6 = arith.constant 0 : i32
    %c0_i32_7 = arith.constant 0 : i32
    %7 = tpu.memref_slice %arg6[%c0_i32_2, %c0_i32_6, %c0_i32_7] : memref<2x8x128xf32, #tpu.memory_space<vmem>> -> memref<1x1x128xf32, #tpu.memory_space<vmem>>
    %8 = tpu.memref_squeeze %7 : memref<1x1x128xf32, #tpu.memory_space<vmem>> -> memref<1x128xf32, #tpu.memory_space<vmem>>
    %9 = tpu.memref_slice %arg7[%c0_i32_3, %c0_i32_4] : memref<2x8x!tpu.dma_semaphore, #tpu.memory_space<semaphore_mem>> -> memref<1x1x!tpu.dma_semaphore, #tpu.memory_space<semaphore_mem>>
    %10 = tpu.memref_squeeze %9 : memref<1x1x!tpu.dma_semaphore, #tpu.memory_space<semaphore_mem>> -> memref<!tpu.dma_semaphore, #tpu.memory_space<semaphore_mem>>
    tpu.enqueue_dma source(%6 : memref<1x128xf32, #tpu.memory_space<any>>) target(%8 : memref<1x128xf32, #tpu.memory_space<vmem>>) target_semaphore(%10 : memref<!tpu.dma_semaphore, #tpu.memory_space<semaphore_mem>>)
    %c1_i32 = arith.constant 1 : i32
    %11 = arith.addi %0, %c1_i32 : i32
    %12 = arith.index_cast %11 : i32 to index
    %c0_8 = arith.constant 0 : index
    %13 = memref.load %arg1[%12, %c0_8] : memref<8x8xi32, #tpu.memory_space<smem>>
    %c0_i32_9 = arith.constant 0 : i32
    %c0_i32_10 = arith.constant 0 : i32
    %c1_i32_11 = arith.constant 1 : i32
    %c0_i32_12 = arith.constant 0 : i32
    %14 = tpu.memref_slice %arg2[%13, %c0_i32_12] : memref<100x128xf32, #tpu.memory_space<any>> -> memref<1x128xf32, #tpu.memory_space<any>>
    %c1_i32_13 = arith.constant 1 : i32
    %c0_i32_14 = arith.constant 0 : i32
    %15 = tpu.memref_slice %arg6[%c0_i32_9, %c1_i32_13, %c0_i32_14] : memref<2x8x128xf32, #tpu.memory_space<vmem>> -> memref<1x1x128xf32, #tpu.memory_space<vmem>>
    %16 = tpu.memref_squeeze %15 : memref<1x1x128xf32, #tpu.memory_space<vmem>> -> memref<1x128xf32, #tpu.memory_space<vmem>>
    %17 = tpu.memref_slice %arg7[%c0_i32_10, %c1_i32_11] : memref<2x8x!tpu.dma_semaphore, #tpu.memory_space<semaphore_mem>> -> memref<1x1x!tpu.dma_semaphore, #tpu.memory_space<semaphore_mem>>
    %18 = tpu.memref_squeeze %17 : memref<1x1x!tpu.dma_semaphore, #tpu.memory_space<semaphore_mem>> -> memref<!tpu.dma_semaphore, #tpu.memory_space<semaphore_mem>>
    tpu.enqueue_dma source(%14 : memref<1x128xf32, #tpu.memory_space<any>>) target(%16 : memref<1x128xf32, #tpu.memory_space<vmem>>) target_semaphore(%18 : memref<!tpu.dma_semaphore, #tpu.memory_space<semaphore_mem>>)
    %c2_i32 = arith.constant 2 : i32
    %19 = arith.addi %0, %c2_i32 : i32
    %20 = arith.index_cast %19 : i32 to index
    %c0_15 = arith.constant 0 : index
    %21 = memref.load %arg1[%20, %c0_15] : memref<8x8xi32, #tpu.memory_space<smem>>
    %c0_i32_16 = arith.constant 0 : i32
    %c0_i32_17 = arith.constant 0 : i32
    %c2_i32_18 = arith.constant 2 : i32
    %c0_i32_19 = arith.constant 0 : i32
    %22 = tpu.memref_slice %arg2[%21, %c0_i32_19] : memref<100x128xf32, #tpu.memory_space<any>> -> memref<1x128xf32, #tpu.memory_space<any>>
    %c2_i32_20 = arith.constant 2 : i32
    %c0_i32_21 = arith.constant 0 : i32
    %23 = tpu.memref_slice %arg6[%c0_i32_16, %c2_i32_20, %c0_i32_21] : memref<2x8x128xf32, #tpu.memory_space<vmem>> -> memref<1x1x128xf32, #tpu.memory_space<vmem>>
    %24 = tpu.memref_squeeze %23 : memref<1x1x128xf32, #tpu.memory_space<vmem>> -> memref<1x128xf32, #tpu.memory_space<vmem>>
    %25 = tpu.memref_slice %arg7[%c0_i32_17, %c2_i32_18] : memref<2x8x!tpu.dma_semaphore, #tpu.memory_space<semaphore_mem>> -> memref<1x1x!tpu.dma_semaphore, #tpu.memory_space<semaphore_mem>>
    %26 = tpu.memref_squeeze %25 : memref<1x1x!tpu.dma_semaphore, #tpu.memory_space<semaphore_mem>> -> memref<!tpu.dma_semaphore, #tpu.memory_space<semaphore_mem>>
    tpu.enqueue_dma source(%22 : memref<1x128xf32, #tpu.memory_space<any>>) target(%24 : memref<1x128xf32, #tpu.memory_space<vmem>>) target_semaphore(%26 : memref<!tpu.dma_semaphore, #tpu.memory_space<semaphore_mem>>)
    %c3_i32 = arith.constant 3 : i32
    %27 = arith.addi %0, %c3_i32 : i32
    %28 = arith.index_cast %27 : i32 to index
    %c0_22 = arith.constant 0 : index
    %29 = memref.load %arg1[%28, %c0_22] : memref<8x8xi32, #tpu.memory_space<smem>>
    %c0_i32_23 = arith.constant 0 : i32
    %c0_i32_24 = arith.constant 0 : i32
    %c3_i32_25 = arith.constant 3 : i32
    %c0_i32_26 = arith.constant 0 : i32
    %30 = tpu.memref_slice %arg2[%29, %c0_i32_26] : memref<100x128xf32, #tpu.memory_space<any>> -> memref<1x128xf32, #tpu.memory_space<any>>
    %c3_i32_27 = arith.constant 3 : i32
    %c0_i32_28 = arith.constant 0 : i32
    %31 = tpu.memref_slice %arg6[%c0_i32_23, %c3_i32_27, %c0_i32_28] : memref<2x8x128xf32, #tpu.memory_space<vmem>> -> memref<1x1x128xf32, #tpu.memory_space<vmem>>
    %32 = tpu.memref_squeeze %31 : memref<1x1x128xf32, #tpu.memory_space<vmem>> -> memref<1x128xf32, #tpu.memory_space<vmem>>
    %33 = tpu.memref_slice %arg7[%c0_i32_24, %c3_i32_25] : memref<2x8x!tpu.dma_semaphore, #tpu.memory_space<semaphore_mem>> -> memref<1x1x!tpu.dma_semaphore, #tpu.memory_space<semaphore_mem>>
    %34 = tpu.memref_squeeze %33 : memref<1x1x!tpu.dma_semaphore, #tpu.memory_space<semaphore_mem>> -> memref<!tpu.dma_semaphore, #tpu.memory_space<semaphore_mem>>
    tpu.enqueue_dma source(%30 : memref<1x128xf32, #tpu.memory_space<any>>) target(%32 : memref<1x128xf32, #tpu.memory_space<vmem>>) target_semaphore(%34 : memref<!tpu.dma_semaphore, #tpu.memory_space<semaphore_mem>>)
    %c4_i32 = arith.constant 4 : i32
    %35 = arith.addi %0, %c4_i32 : i32
    %36 = arith.index_cast %35 : i32 to index
    %c0_29 = arith.constant 0 : index
    %37 = memref.load %arg1[%36, %c0_29] : memref<8x8xi32, #tpu.memory_space<smem>>
    %c0_i32_30 = arith.constant 0 : i32
    %c0_i32_31 = arith.constant 0 : i32
    %c4_i32_32 = arith.constant 4 : i32
    %c0_i32_33 = arith.constant 0 : i32
    %38 = tpu.memref_slice %arg2[%37, %c0_i32_33] : memref<100x128xf32, #tpu.memory_space<any>> -> memref<1x128xf32, #tpu.memory_space<any>>
    %c4_i32_34 = arith.constant 4 : i32
    %c0_i32_35 = arith.constant 0 : i32
    %39 = tpu.memref_slice %arg6[%c0_i32_30, %c4_i32_34, %c0_i32_35] : memref<2x8x128xf32, #tpu.memory_space<vmem>> -> memref<1x1x128xf32, #tpu.memory_space<vmem>>
    %40 = tpu.memref_squeeze %39 : memref<1x1x128xf32, #tpu.memory_space<vmem>> -> memref<1x128xf32, #tpu.memory_space<vmem>>
    %41 = tpu.memref_slice %arg7[%c0_i32_31, %c4_i32_32] : memref<2x8x!tpu.dma_semaphore, #tpu.memory_space<semaphore_mem>> -> memref<1x1x!tpu.dma_semaphore, #tpu.memory_space<semaphore_mem>>
    %42 = tpu.memref_squeeze %41 : memref<1x1x!tpu.dma_semaphore, #tpu.memory_space<semaphore_mem>> -> memref<!tpu.dma_semaphore, #tpu.memory_space<semaphore_mem>>
    tpu.enqueue_dma source(%38 : memref<1x128xf32, #tpu.memory_space<any>>) target(%40 : memref<1x128xf32, #tpu.memory_space<vmem>>) target_semaphore(%42 : memref<!tpu.dma_semaphore, #tpu.memory_space<semaphore_mem>>)
    %c5_i32 = arith.constant 5 : i32
    %43 = arith.addi %0, %c5_i32 : i32
    %44 = arith.index_cast %43 : i32 to index
    %c0_36 = arith.constant 0 : index
    %45 = memref.load %arg1[%44, %c0_36] : memref<8x8xi32, #tpu.memory_space<smem>>
    %c0_i32_37 = arith.constant 0 : i32
    %c0_i32_38 = arith.constant 0 : i32
    %c5_i32_39 = arith.constant 5 : i32
    %c0_i32_40 = arith.constant 0 : i32
    %46 = tpu.memref_slice %arg2[%45, %c0_i32_40] : memref<100x128xf32, #tpu.memory_space<any>> -> memref<1x128xf32, #tpu.memory_space<any>>
    %c5_i32_41 = arith.constant 5 : i32
    %c0_i32_42 = arith.constant 0 : i32
    %47 = tpu.memref_slice %arg6[%c0_i32_37, %c5_i32_41, %c0_i32_42] : memref<2x8x128xf32, #tpu.memory_space<vmem>> -> memref<1x1x128xf32, #tpu.memory_space<vmem>>
    %48 = tpu.memref_squeeze %47 : memref<1x1x128xf32, #tpu.memory_space<vmem>> -> memref<1x128xf32, #tpu.memory_space<vmem>>
    %49 = tpu.memref_slice %arg7[%c0_i32_38, %c5_i32_39] : memref<2x8x!tpu.dma_semaphore, #tpu.memory_space<semaphore_mem>> -> memref<1x1x!tpu.dma_semaphore, #tpu.memory_space<semaphore_mem>>
    %50 = tpu.memref_squeeze %49 : memref<1x1x!tpu.dma_semaphore, #tpu.memory_space<semaphore_mem>> -> memref<!tpu.dma_semaphore, #tpu.memory_space<semaphore_mem>>
    tpu.enqueue_dma source(%46 : memref<1x128xf32, #tpu.memory_space<any>>) target(%48 : memref<1x128xf32, #tpu.memory_space<vmem>>) target_semaphore(%50 : memref<!tpu.dma_semaphore, #tpu.memory_space<semaphore_mem>>)
    %c6_i32 = arith.constant 6 : i32
    %51 = arith.addi %0, %c6_i32 : i32
    %52 = arith.index_cast %51 : i32 to index
    %c0_43 = arith.constant 0 : index
    %53 = memref.load %arg1[%52, %c0_43] : memref<8x8xi32, #tpu.memory_space<smem>>
    %c0_i32_44 = arith.constant 0 : i32
    %c0_i32_45 = arith.constant 0 : i32
    %c6_i32_46 = arith.constant 6 : i32
    %c0_i32_47 = arith.constant 0 : i32
    %54 = tpu.memref_slice %arg2[%53, %c0_i32_47] : memref<100x128xf32, #tpu.memory_space<any>> -> memref<1x128xf32, #tpu.memory_space<any>>
    %c6_i32_48 = arith.constant 6 : i32
    %c0_i32_49 = arith.constant 0 : i32
    %55 = tpu.memref_slice %arg6[%c0_i32_44, %c6_i32_48, %c0_i32_49] : memref<2x8x128xf32, #tpu.memory_space<vmem>> -> memref<1x1x128xf32, #tpu.memory_space<vmem>>
    %56 = tpu.memref_squeeze %55 : memref<1x1x128xf32, #tpu.memory_space<vmem>> -> memref<1x128xf32, #tpu.memory_space<vmem>>
    %57 = tpu.memref_slice %arg7[%c0_i32_45, %c6_i32_46] : memref<2x8x!tpu.dma_semaphore, #tpu.memory_space<semaphore_mem>> -> memref<1x1x!tpu.dma_semaphore, #tpu.memory_space<semaphore_mem>>
    %58 = tpu.memref_squeeze %57 : memref<1x1x!tpu.dma_semaphore, #tpu.memory_space<semaphore_mem>> -> memref<!tpu.dma_semaphore, #tpu.memory_space<semaphore_mem>>
    tpu.enqueue_dma source(%54 : memref<1x128xf32, #tpu.memory_space<any>>) target(%56 : memref<1x128xf32, #tpu.memory_space<vmem>>) target_semaphore(%58 : memref<!tpu.dma_semaphore, #tpu.memory_space<semaphore_mem>>)
    %c7_i32 = arith.constant 7 : i32
    %59 = arith.addi %0, %c7_i32 : i32
    %60 = arith.index_cast %59 : i32 to index
    %c0_50 = arith.constant 0 : index
    %61 = memref.load %arg1[%60, %c0_50] : memref<8x8xi32, #tpu.memory_space<smem>>
    %c0_i32_51 = arith.constant 0 : i32
    %c0_i32_52 = arith.constant 0 : i32
    %c7_i32_53 = arith.constant 7 : i32
    %c0_i32_54 = arith.constant 0 : i32
    %62 = tpu.memref_slice %arg2[%61, %c0_i32_54] : memref<100x128xf32, #tpu.memory_space<any>> -> memref<1x128xf32, #tpu.memory_space<any>>
    %c7_i32_55 = arith.constant 7 : i32
    %c0_i32_56 = arith.constant 0 : i32
    %63 = tpu.memref_slice %arg6[%c0_i32_51, %c7_i32_55, %c0_i32_56] : memref<2x8x128xf32, #tpu.memory_space<vmem>> -> memref<1x1x128xf32, #tpu.memory_space<vmem>>
    %64 = tpu.memref_squeeze %63 : memref<1x1x128xf32, #tpu.memory_space<vmem>> -> memref<1x128xf32, #tpu.memory_space<vmem>>
    %65 = tpu.memref_slice %arg7[%c0_i32_52, %c7_i32_53] : memref<2x8x!tpu.dma_semaphore, #tpu.memory_space<semaphore_mem>> -> memref<1x1x!tpu.dma_semaphore, #tpu.memory_space<semaphore_mem>>
    %66 = tpu.memref_squeeze %65 : memref<1x1x!tpu.dma_semaphore, #tpu.memory_space<semaphore_mem>> -> memref<!tpu.dma_semaphore, #tpu.memory_space<semaphore_mem>>
    tpu.enqueue_dma source(%62 : memref<1x128xf32, #tpu.memory_space<any>>) target(%64 : memref<1x128xf32, #tpu.memory_space<vmem>>) target_semaphore(%66 : memref<!tpu.dma_semaphore, #tpu.memory_space<semaphore_mem>>)
    %c0_i32_57 = arith.constant 0 : i32
    %c8_i32_58 = arith.constant 8 : i32
    %67 = arith.addi %c0_i32_57, %c8_i32_58 : i32
    %c1_i32_59 = arith.constant 1 : i32
    scf.for %arg9 = %c0_i32_57 to %67 step %c1_i32_59  : i32 {
      %c1_i32_70 = arith.constant 1 : i32
      %75 = arith.muli %arg9, %c1_i32_70 : i32
      %c0_i32_71 = arith.constant 0 : i32
      %76 = arith.addi %c0_i32_71, %75 : i32
      %c2_i32_72 = arith.constant 2 : i32
      %c0_i32_73 = arith.constant 0 : i32
      %77 = arith.cmpi eq, %c2_i32_72, %c0_i32_73 : i32
      %c1_i32_74 = arith.constant 1 : i32
      %78 = arith.select %77, %c1_i32_74, %c2_i32_72 : i32
      %79 = arith.remsi %76, %78 : i32
      %c0_i32_75 = arith.constant 0 : i32
      %80 = arith.cmpi ne, %79, %c0_i32_75 : i32
      %c0_i32_76 = arith.constant 0 : i32
      %81 = arith.cmpi slt, %79, %c0_i32_76 : i32
      %c0_i32_77 = arith.constant 0 : i32
      %82 = arith.cmpi slt, %78, %c0_i32_77 : i32
      %83 = arith.xori %81, %82 : i1
      %84 = arith.andi %83, %80 : i1
      %85 = arith.addi %79, %78 : i32
      %86 = arith.select %84, %85, %79 : i32
      %c0_i32_78 = arith.constant 0 : i32
      %c0_i32_79 = arith.constant 0 : i32
      %c0_i32_80 = arith.constant 0 : i32
      %87 = tpu.memref_slice %arg2[%c0_i32_79, %c0_i32_80] : memref<100x128xf32, #tpu.memory_space<any>> -> memref<1x128xf32, #tpu.memory_space<any>>
      %c0_i32_81 = arith.constant 0 : i32
      %c0_i32_82 = arith.constant 0 : i32
      %88 = tpu.memref_slice %arg6[%86, %c0_i32_81, %c0_i32_82] : memref<2x8x128xf32, #tpu.memory_space<vmem>> -> memref<1x1x128xf32, #tpu.memory_space<vmem>>
      %89 = tpu.memref_squeeze %88 : memref<1x1x128xf32, #tpu.memory_space<vmem>> -> memref<1x128xf32, #tpu.memory_space<vmem>>
      %90 = tpu.memref_slice %arg7[%86, %c0_i32_78] : memref<2x8x!tpu.dma_semaphore, #tpu.memory_space<semaphore_mem>> -> memref<1x1x!tpu.dma_semaphore, #tpu.memory_space<semaphore_mem>>
      %91 = tpu.memref_squeeze %90 : memref<1x1x!tpu.dma_semaphore, #tpu.memory_space<semaphore_mem>> -> memref<!tpu.dma_semaphore, #tpu.memory_space<semaphore_mem>>
      tpu.wait_dma2 semaphore(%91 : memref<!tpu.dma_semaphore, #tpu.memory_space<semaphore_mem>>) src(%87 : memref<1x128xf32, #tpu.memory_space<any>>) dst(%89 : memref<1x128xf32, #tpu.memory_space<vmem>>)
      %c1_i32_83 = arith.constant 1 : i32
      %c0_i32_84 = arith.constant 0 : i32
      %c0_i32_85 = arith.constant 0 : i32
      %92 = tpu.memref_slice %arg2[%c0_i32_84, %c0_i32_85] : memref<100x128xf32, #tpu.memory_space<any>> -> memref<1x128xf32, #tpu.memory_space<any>>
      %c1_i32_86 = arith.constant 1 : i32
      %c0_i32_87 = arith.constant 0 : i32
      %93 = tpu.memref_slice %arg6[%86, %c1_i32_86, %c0_i32_87] : memref<2x8x128xf32, #tpu.memory_space<vmem>> -> memref<1x1x128xf32, #tpu.memory_space<vmem>>
      %94 = tpu.memref_squeeze %93 : memref<1x1x128xf32, #tpu.memory_space<vmem>> -> memref<1x128xf32, #tpu.memory_space<vmem>>
      %95 = tpu.memref_slice %arg7[%86, %c1_i32_83] : memref<2x8x!tpu.dma_semaphore, #tpu.memory_space<semaphore_mem>> -> memref<1x1x!tpu.dma_semaphore, #tpu.memory_space<semaphore_mem>>
      %96 = tpu.memref_squeeze %95 : memref<1x1x!tpu.dma_semaphore, #tpu.memory_space<semaphore_mem>> -> memref<!tpu.dma_semaphore, #tpu.memory_space<semaphore_mem>>
      tpu.wait_dma2 semaphore(%96 : memref<!tpu.dma_semaphore, #tpu.memory_space<semaphore_mem>>) src(%92 : memref<1x128xf32, #tpu.memory_space<any>>) dst(%94 : memref<1x128xf32, #tpu.memory_space<vmem>>)
      %c2_i32_88 = arith.constant 2 : i32
      %c0_i32_89 = arith.constant 0 : i32
      %c0_i32_90 = arith.constant 0 : i32
      %97 = tpu.memref_slice %arg2[%c0_i32_89, %c0_i32_90] : memref<100x128xf32, #tpu.memory_space<any>> -> memref<1x128xf32, #tpu.memory_space<any>>
      %c2_i32_91 = arith.constant 2 : i32
      %c0_i32_92 = arith.constant 0 : i32
      %98 = tpu.memref_slice %arg6[%86, %c2_i32_91, %c0_i32_92] : memref<2x8x128xf32, #tpu.memory_space<vmem>> -> memref<1x1x128xf32, #tpu.memory_space<vmem>>
      %99 = tpu.memref_squeeze %98 : memref<1x1x128xf32, #tpu.memory_space<vmem>> -> memref<1x128xf32, #tpu.memory_space<vmem>>
      %100 = tpu.memref_slice %arg7[%86, %c2_i32_88] : memref<2x8x!tpu.dma_semaphore, #tpu.memory_space<semaphore_mem>> -> memref<1x1x!tpu.dma_semaphore, #tpu.memory_space<semaphore_mem>>
      %101 = tpu.memref_squeeze %100 : memref<1x1x!tpu.dma_semaphore, #tpu.memory_space<semaphore_mem>> -> memref<!tpu.dma_semaphore, #tpu.memory_space<semaphore_mem>>
      tpu.wait_dma2 semaphore(%101 : memref<!tpu.dma_semaphore, #tpu.memory_space<semaphore_mem>>) src(%97 : memref<1x128xf32, #tpu.memory_space<any>>) dst(%99 : memref<1x128xf32, #tpu.memory_space<vmem>>)
      %c3_i32_93 = arith.constant 3 : i32
      %c0_i32_94 = arith.constant 0 : i32
      %c0_i32_95 = arith.constant 0 : i32
      %102 = tpu.memref_slice %arg2[%c0_i32_94, %c0_i32_95] : memref<100x128xf32, #tpu.memory_space<any>> -> memref<1x128xf32, #tpu.memory_space<any>>
      %c3_i32_96 = arith.constant 3 : i32
      %c0_i32_97 = arith.constant 0 : i32
      %103 = tpu.memref_slice %arg6[%86, %c3_i32_96, %c0_i32_97] : memref<2x8x128xf32, #tpu.memory_space<vmem>> -> memref<1x1x128xf32, #tpu.memory_space<vmem>>
      %104 = tpu.memref_squeeze %103 : memref<1x1x128xf32, #tpu.memory_space<vmem>> -> memref<1x128xf32, #tpu.memory_space<vmem>>
      %105 = tpu.memref_slice %arg7[%86, %c3_i32_93] : memref<2x8x!tpu.dma_semaphore, #tpu.memory_space<semaphore_mem>> -> memref<1x1x!tpu.dma_semaphore, #tpu.memory_space<semaphore_mem>>
      %106 = tpu.memref_squeeze %105 : memref<1x1x!tpu.dma_semaphore, #tpu.memory_space<semaphore_mem>> -> memref<!tpu.dma_semaphore, #tpu.memory_space<semaphore_mem>>
      tpu.wait_dma2 semaphore(%106 : memref<!tpu.dma_semaphore, #tpu.memory_space<semaphore_mem>>) src(%102 : memref<1x128xf32, #tpu.memory_space<any>>) dst(%104 : memref<1x128xf32, #tpu.memory_space<vmem>>)
      %c4_i32_98 = arith.constant 4 : i32
      %c0_i32_99 = arith.constant 0 : i32
      %c0_i32_100 = arith.constant 0 : i32
      %107 = tpu.memref_slice %arg2[%c0_i32_99, %c0_i32_100] : memref<100x128xf32, #tpu.memory_space<any>> -> memref<1x128xf32, #tpu.memory_space<any>>
      %c4_i32_101 = arith.constant 4 : i32
      %c0_i32_102 = arith.constant 0 : i32
      %108 = tpu.memref_slice %arg6[%86, %c4_i32_101, %c0_i32_102] : memref<2x8x128xf32, #tpu.memory_space<vmem>> -> memref<1x1x128xf32, #tpu.memory_space<vmem>>
      %109 = tpu.memref_squeeze %108 : memref<1x1x128xf32, #tpu.memory_space<vmem>> -> memref<1x128xf32, #tpu.memory_space<vmem>>
      %110 = tpu.memref_slice %arg7[%86, %c4_i32_98] : memref<2x8x!tpu.dma_semaphore, #tpu.memory_space<semaphore_mem>> -> memref<1x1x!tpu.dma_semaphore, #tpu.memory_space<semaphore_mem>>
      %111 = tpu.memref_squeeze %110 : memref<1x1x!tpu.dma_semaphore, #tpu.memory_space<semaphore_mem>> -> memref<!tpu.dma_semaphore, #tpu.memory_space<semaphore_mem>>
      tpu.wait_dma2 semaphore(%111 : memref<!tpu.dma_semaphore, #tpu.memory_space<semaphore_mem>>) src(%107 : memref<1x128xf32, #tpu.memory_space<any>>) dst(%109 : memref<1x128xf32, #tpu.memory_space<vmem>>)
      %c5_i32_103 = arith.constant 5 : i32
      %c0_i32_104 = arith.constant 0 : i32
      %c0_i32_105 = arith.constant 0 : i32
      %112 = tpu.memref_slice %arg2[%c0_i32_104, %c0_i32_105] : memref<100x128xf32, #tpu.memory_space<any>> -> memref<1x128xf32, #tpu.memory_space<any>>
      %c5_i32_106 = arith.constant 5 : i32
      %c0_i32_107 = arith.constant 0 : i32
      %113 = tpu.memref_slice %arg6[%86, %c5_i32_106, %c0_i32_107] : memref<2x8x128xf32, #tpu.memory_space<vmem>> -> memref<1x1x128xf32, #tpu.memory_space<vmem>>
      %114 = tpu.memref_squeeze %113 : memref<1x1x128xf32, #tpu.memory_space<vmem>> -> memref<1x128xf32, #tpu.memory_space<vmem>>
      %115 = tpu.memref_slice %arg7[%86, %c5_i32_103] : memref<2x8x!tpu.dma_semaphore, #tpu.memory_space<semaphore_mem>> -> memref<1x1x!tpu.dma_semaphore, #tpu.memory_space<semaphore_mem>>
      %116 = tpu.memref_squeeze %115 : memref<1x1x!tpu.dma_semaphore, #tpu.memory_space<semaphore_mem>> -> memref<!tpu.dma_semaphore, #tpu.memory_space<semaphore_mem>>
      tpu.wait_dma2 semaphore(%116 : memref<!tpu.dma_semaphore, #tpu.memory_space<semaphore_mem>>) src(%112 : memref<1x128xf32, #tpu.memory_space<any>>) dst(%114 : memref<1x128xf32, #tpu.memory_space<vmem>>)
      %c6_i32_108 = arith.constant 6 : i32
      %c0_i32_109 = arith.constant 0 : i32
      %c0_i32_110 = arith.constant 0 : i32
      %117 = tpu.memref_slice %arg2[%c0_i32_109, %c0_i32_110] : memref<100x128xf32, #tpu.memory_space<any>> -> memref<1x128xf32, #tpu.memory_space<any>>
      %c6_i32_111 = arith.constant 6 : i32
      %c0_i32_112 = arith.constant 0 : i32
      %118 = tpu.memref_slice %arg6[%86, %c6_i32_111, %c0_i32_112] : memref<2x8x128xf32, #tpu.memory_space<vmem>> -> memref<1x1x128xf32, #tpu.memory_space<vmem>>
      %119 = tpu.memref_squeeze %118 : memref<1x1x128xf32, #tpu.memory_space<vmem>> -> memref<1x128xf32, #tpu.memory_space<vmem>>
      %120 = tpu.memref_slice %arg7[%86, %c6_i32_108] : memref<2x8x!tpu.dma_semaphore, #tpu.memory_space<semaphore_mem>> -> memref<1x1x!tpu.dma_semaphore, #tpu.memory_space<semaphore_mem>>
      %121 = tpu.memref_squeeze %120 : memref<1x1x!tpu.dma_semaphore, #tpu.memory_space<semaphore_mem>> -> memref<!tpu.dma_semaphore, #tpu.memory_space<semaphore_mem>>
      tpu.wait_dma2 semaphore(%121 : memref<!tpu.dma_semaphore, #tpu.memory_space<semaphore_mem>>) src(%117 : memref<1x128xf32, #tpu.memory_space<any>>) dst(%119 : memref<1x128xf32, #tpu.memory_space<vmem>>)
      %c7_i32_113 = arith.constant 7 : i32
      %c0_i32_114 = arith.constant 0 : i32
      %c0_i32_115 = arith.constant 0 : i32
      %122 = tpu.memref_slice %arg2[%c0_i32_114, %c0_i32_115] : memref<100x128xf32, #tpu.memory_space<any>> -> memref<1x128xf32, #tpu.memory_space<any>>
      %c7_i32_116 = arith.constant 7 : i32
      %c0_i32_117 = arith.constant 0 : i32
      %123 = tpu.memref_slice %arg6[%86, %c7_i32_116, %c0_i32_117] : memref<2x8x128xf32, #tpu.memory_space<vmem>> -> memref<1x1x128xf32, #tpu.memory_space<vmem>>
      %124 = tpu.memref_squeeze %123 : memref<1x1x128xf32, #tpu.memory_space<vmem>> -> memref<1x128xf32, #tpu.memory_space<vmem>>
      %125 = tpu.memref_slice %arg7[%86, %c7_i32_113] : memref<2x8x!tpu.dma_semaphore, #tpu.memory_space<semaphore_mem>> -> memref<1x1x!tpu.dma_semaphore, #tpu.memory_space<semaphore_mem>>
      %126 = tpu.memref_squeeze %125 : memref<1x1x!tpu.dma_semaphore, #tpu.memory_space<semaphore_mem>> -> memref<!tpu.dma_semaphore, #tpu.memory_space<semaphore_mem>>
      tpu.wait_dma2 semaphore(%126 : memref<!tpu.dma_semaphore, #tpu.memory_space<semaphore_mem>>) src(%122 : memref<1x128xf32, #tpu.memory_space<any>>) dst(%124 : memref<1x128xf32, #tpu.memory_space<vmem>>)
      %c1_i32_118 = arith.constant 1 : i32
      %127 = arith.addi %76, %c1_i32_118 : i32
      %c8_i32_119 = arith.constant 8 : i32
      %128 = arith.cmpi slt, %127, %c8_i32_119 : i32
      %129 = arith.extui %128 : i1 to i32
      %c0_i32_120 = arith.constant 0 : i32
      %130 = arith.cmpi ne, %129, %c0_i32_120 : i32
      scf.if %130 {
        %c1_i32_127 = arith.constant 1 : i32
        %137 = arith.addi %76, %c1_i32_127 : i32
        %c1_i32_128 = arith.constant 1 : i32
        %138 = arith.subi %c1_i32_128, %86 : i32
        %c0_i32_129 = arith.constant 0 : i32
        %139 = arith.addi %0, %c0_i32_129 : i32
        %140 = arith.index_cast %139 : i32 to index
        %141 = arith.index_cast %137 : i32 to index
        %142 = memref.load %arg1[%140, %141] : memref<8x8xi32, #tpu.memory_space<smem>>
        %c0_i32_130 = arith.constant 0 : i32
        %c0_i32_131 = arith.constant 0 : i32
        %143 = tpu.memref_slice %arg2[%142, %c0_i32_131] : memref<100x128xf32, #tpu.memory_space<any>> -> memref<1x128xf32, #tpu.memory_space<any>>
        %c0_i32_132 = arith.constant 0 : i32
        %c0_i32_133 = arith.constant 0 : i32
        %144 = tpu.memref_slice %arg6[%138, %c0_i32_132, %c0_i32_133] : memref<2x8x128xf32, #tpu.memory_space<vmem>> -> memref<1x1x128xf32, #tpu.memory_space<vmem>>
        %145 = tpu.memref_squeeze %144 : memref<1x1x128xf32, #tpu.memory_space<vmem>> -> memref<1x128xf32, #tpu.memory_space<vmem>>
        %146 = tpu.memref_slice %arg7[%138, %c0_i32_130] : memref<2x8x!tpu.dma_semaphore, #tpu.memory_space<semaphore_mem>> -> memref<1x1x!tpu.dma_semaphore, #tpu.memory_space<semaphore_mem>>
        %147 = tpu.memref_squeeze %146 : memref<1x1x!tpu.dma_semaphore, #tpu.memory_space<semaphore_mem>> -> memref<!tpu.dma_semaphore, #tpu.memory_space<semaphore_mem>>
        tpu.enqueue_dma source(%143 : memref<1x128xf32, #tpu.memory_space<any>>) target(%145 : memref<1x128xf32, #tpu.memory_space<vmem>>) target_semaphore(%147 : memref<!tpu.dma_semaphore, #tpu.memory_space<semaphore_mem>>)
        %c1_i32_134 = arith.constant 1 : i32
        %148 = arith.addi %0, %c1_i32_134 : i32
        %149 = arith.index_cast %148 : i32 to index
        %150 = arith.index_cast %137 : i32 to index
        %151 = memref.load %arg1[%149, %150] : memref<8x8xi32, #tpu.memory_space<smem>>
        %c1_i32_135 = arith.constant 1 : i32
        %c0_i32_136 = arith.constant 0 : i32
        %152 = tpu.memref_slice %arg2[%151, %c0_i32_136] : memref<100x128xf32, #tpu.memory_space<any>> -> memref<1x128xf32, #tpu.memory_space<any>>
        %c1_i32_137 = arith.constant 1 : i32
        %c0_i32_138 = arith.constant 0 : i32
        %153 = tpu.memref_slice %arg6[%138, %c1_i32_137, %c0_i32_138] : memref<2x8x128xf32, #tpu.memory_space<vmem>> -> memref<1x1x128xf32, #tpu.memory_space<vmem>>
        %154 = tpu.memref_squeeze %153 : memref<1x1x128xf32, #tpu.memory_space<vmem>> -> memref<1x128xf32, #tpu.memory_space<vmem>>
        %155 = tpu.memref_slice %arg7[%138, %c1_i32_135] : memref<2x8x!tpu.dma_semaphore, #tpu.memory_space<semaphore_mem>> -> memref<1x1x!tpu.dma_semaphore, #tpu.memory_space<semaphore_mem>>
        %156 = tpu.memref_squeeze %155 : memref<1x1x!tpu.dma_semaphore, #tpu.memory_space<semaphore_mem>> -> memref<!tpu.dma_semaphore, #tpu.memory_space<semaphore_mem>>
        tpu.enqueue_dma source(%152 : memref<1x128xf32, #tpu.memory_space<any>>) target(%154 : memref<1x128xf32, #tpu.memory_space<vmem>>) target_semaphore(%156 : memref<!tpu.dma_semaphore, #tpu.memory_space<semaphore_mem>>)
        %c2_i32_139 = arith.constant 2 : i32
        %157 = arith.addi %0, %c2_i32_139 : i32
        %158 = arith.index_cast %157 : i32 to index
        %159 = arith.index_cast %137 : i32 to index
        %160 = memref.load %arg1[%158, %159] : memref<8x8xi32, #tpu.memory_space<smem>>
        %c2_i32_140 = arith.constant 2 : i32
        %c0_i32_141 = arith.constant 0 : i32
        %161 = tpu.memref_slice %arg2[%160, %c0_i32_141] : memref<100x128xf32, #tpu.memory_space<any>> -> memref<1x128xf32, #tpu.memory_space<any>>
        %c2_i32_142 = arith.constant 2 : i32
        %c0_i32_143 = arith.constant 0 : i32
        %162 = tpu.memref_slice %arg6[%138, %c2_i32_142, %c0_i32_143] : memref<2x8x128xf32, #tpu.memory_space<vmem>> -> memref<1x1x128xf32, #tpu.memory_space<vmem>>
        %163 = tpu.memref_squeeze %162 : memref<1x1x128xf32, #tpu.memory_space<vmem>> -> memref<1x128xf32, #tpu.memory_space<vmem>>
        %164 = tpu.memref_slice %arg7[%138, %c2_i32_140] : memref<2x8x!tpu.dma_semaphore, #tpu.memory_space<semaphore_mem>> -> memref<1x1x!tpu.dma_semaphore, #tpu.memory_space<semaphore_mem>>
        %165 = tpu.memref_squeeze %164 : memref<1x1x!tpu.dma_semaphore, #tpu.memory_space<semaphore_mem>> -> memref<!tpu.dma_semaphore, #tpu.memory_space<semaphore_mem>>
        tpu.enqueue_dma source(%161 : memref<1x128xf32, #tpu.memory_space<any>>) target(%163 : memref<1x128xf32, #tpu.memory_space<vmem>>) target_semaphore(%165 : memref<!tpu.dma_semaphore, #tpu.memory_space<semaphore_mem>>)
        %c3_i32_144 = arith.constant 3 : i32
        %166 = arith.addi %0, %c3_i32_144 : i32
        %167 = arith.index_cast %166 : i32 to index
        %168 = arith.index_cast %137 : i32 to index
        %169 = memref.load %arg1[%167, %168] : memref<8x8xi32, #tpu.memory_space<smem>>
        %c3_i32_145 = arith.constant 3 : i32
        %c0_i32_146 = arith.constant 0 : i32
        %170 = tpu.memref_slice %arg2[%169, %c0_i32_146] : memref<100x128xf32, #tpu.memory_space<any>> -> memref<1x128xf32, #tpu.memory_space<any>>
        %c3_i32_147 = arith.constant 3 : i32
        %c0_i32_148 = arith.constant 0 : i32
        %171 = tpu.memref_slice %arg6[%138, %c3_i32_147, %c0_i32_148] : memref<2x8x128xf32, #tpu.memory_space<vmem>> -> memref<1x1x128xf32, #tpu.memory_space<vmem>>
        %172 = tpu.memref_squeeze %171 : memref<1x1x128xf32, #tpu.memory_space<vmem>> -> memref<1x128xf32, #tpu.memory_space<vmem>>
        %173 = tpu.memref_slice %arg7[%138, %c3_i32_145] : memref<2x8x!tpu.dma_semaphore, #tpu.memory_space<semaphore_mem>> -> memref<1x1x!tpu.dma_semaphore, #tpu.memory_space<semaphore_mem>>
        %174 = tpu.memref_squeeze %173 : memref<1x1x!tpu.dma_semaphore, #tpu.memory_space<semaphore_mem>> -> memref<!tpu.dma_semaphore, #tpu.memory_space<semaphore_mem>>
        tpu.enqueue_dma source(%170 : memref<1x128xf32, #tpu.memory_space<any>>) target(%172 : memref<1x128xf32, #tpu.memory_space<vmem>>) target_semaphore(%174 : memref<!tpu.dma_semaphore, #tpu.memory_space<semaphore_mem>>)
        %c4_i32_149 = arith.constant 4 : i32
        %175 = arith.addi %0, %c4_i32_149 : i32
        %176 = arith.index_cast %175 : i32 to index
        %177 = arith.index_cast %137 : i32 to index
        %178 = memref.load %arg1[%176, %177] : memref<8x8xi32, #tpu.memory_space<smem>>
        %c4_i32_150 = arith.constant 4 : i32
        %c0_i32_151 = arith.constant 0 : i32
        %179 = tpu.memref_slice %arg2[%178, %c0_i32_151] : memref<100x128xf32, #tpu.memory_space<any>> -> memref<1x128xf32, #tpu.memory_space<any>>
        %c4_i32_152 = arith.constant 4 : i32
        %c0_i32_153 = arith.constant 0 : i32
        %180 = tpu.memref_slice %arg6[%138, %c4_i32_152, %c0_i32_153] : memref<2x8x128xf32, #tpu.memory_space<vmem>> -> memref<1x1x128xf32, #tpu.memory_space<vmem>>
        %181 = tpu.memref_squeeze %180 : memref<1x1x128xf32, #tpu.memory_space<vmem>> -> memref<1x128xf32, #tpu.memory_space<vmem>>
        %182 = tpu.memref_slice %arg7[%138, %c4_i32_150] : memref<2x8x!tpu.dma_semaphore, #tpu.memory_space<semaphore_mem>> -> memref<1x1x!tpu.dma_semaphore, #tpu.memory_space<semaphore_mem>>
        %183 = tpu.memref_squeeze %182 : memref<1x1x!tpu.dma_semaphore, #tpu.memory_space<semaphore_mem>> -> memref<!tpu.dma_semaphore, #tpu.memory_space<semaphore_mem>>
        tpu.enqueue_dma source(%179 : memref<1x128xf32, #tpu.memory_space<any>>) target(%181 : memref<1x128xf32, #tpu.memory_space<vmem>>) target_semaphore(%183 : memref<!tpu.dma_semaphore, #tpu.memory_space<semaphore_mem>>)
        %c5_i32_154 = arith.constant 5 : i32
        %184 = arith.addi %0, %c5_i32_154 : i32
        %185 = arith.index_cast %184 : i32 to index
        %186 = arith.index_cast %137 : i32 to index
        %187 = memref.load %arg1[%185, %186] : memref<8x8xi32, #tpu.memory_space<smem>>
        %c5_i32_155 = arith.constant 5 : i32
        %c0_i32_156 = arith.constant 0 : i32
        %188 = tpu.memref_slice %arg2[%187, %c0_i32_156] : memref<100x128xf32, #tpu.memory_space<any>> -> memref<1x128xf32, #tpu.memory_space<any>>
        %c5_i32_157 = arith.constant 5 : i32
        %c0_i32_158 = arith.constant 0 : i32
        %189 = tpu.memref_slice %arg6[%138, %c5_i32_157, %c0_i32_158] : memref<2x8x128xf32, #tpu.memory_space<vmem>> -> memref<1x1x128xf32, #tpu.memory_space<vmem>>
        %190 = tpu.memref_squeeze %189 : memref<1x1x128xf32, #tpu.memory_space<vmem>> -> memref<1x128xf32, #tpu.memory_space<vmem>>
        %191 = tpu.memref_slice %arg7[%138, %c5_i32_155] : memref<2x8x!tpu.dma_semaphore, #tpu.memory_space<semaphore_mem>> -> memref<1x1x!tpu.dma_semaphore, #tpu.memory_space<semaphore_mem>>
        %192 = tpu.memref_squeeze %191 : memref<1x1x!tpu.dma_semaphore, #tpu.memory_space<semaphore_mem>> -> memref<!tpu.dma_semaphore, #tpu.memory_space<semaphore_mem>>
        tpu.enqueue_dma source(%188 : memref<1x128xf32, #tpu.memory_space<any>>) target(%190 : memref<1x128xf32, #tpu.memory_space<vmem>>) target_semaphore(%192 : memref<!tpu.dma_semaphore, #tpu.memory_space<semaphore_mem>>)
        %c6_i32_159 = arith.constant 6 : i32
        %193 = arith.addi %0, %c6_i32_159 : i32
        %194 = arith.index_cast %193 : i32 to index
        %195 = arith.index_cast %137 : i32 to index
        %196 = memref.load %arg1[%194, %195] : memref<8x8xi32, #tpu.memory_space<smem>>
        %c6_i32_160 = arith.constant 6 : i32
        %c0_i32_161 = arith.constant 0 : i32
        %197 = tpu.memref_slice %arg2[%196, %c0_i32_161] : memref<100x128xf32, #tpu.memory_space<any>> -> memref<1x128xf32, #tpu.memory_space<any>>
        %c6_i32_162 = arith.constant 6 : i32
        %c0_i32_163 = arith.constant 0 : i32
        %198 = tpu.memref_slice %arg6[%138, %c6_i32_162, %c0_i32_163] : memref<2x8x128xf32, #tpu.memory_space<vmem>> -> memref<1x1x128xf32, #tpu.memory_space<vmem>>
        %199 = tpu.memref_squeeze %198 : memref<1x1x128xf32, #tpu.memory_space<vmem>> -> memref<1x128xf32, #tpu.memory_space<vmem>>
        %200 = tpu.memref_slice %arg7[%138, %c6_i32_160] : memref<2x8x!tpu.dma_semaphore, #tpu.memory_space<semaphore_mem>> -> memref<1x1x!tpu.dma_semaphore, #tpu.memory_space<semaphore_mem>>
        %201 = tpu.memref_squeeze %200 : memref<1x1x!tpu.dma_semaphore, #tpu.memory_space<semaphore_mem>> -> memref<!tpu.dma_semaphore, #tpu.memory_space<semaphore_mem>>
        tpu.enqueue_dma source(%197 : memref<1x128xf32, #tpu.memory_space<any>>) target(%199 : memref<1x128xf32, #tpu.memory_space<vmem>>) target_semaphore(%201 : memref<!tpu.dma_semaphore, #tpu.memory_space<semaphore_mem>>)
        %c7_i32_164 = arith.constant 7 : i32
        %202 = arith.addi %0, %c7_i32_164 : i32
        %203 = arith.index_cast %202 : i32 to index
        %204 = arith.index_cast %137 : i32 to index
        %205 = memref.load %arg1[%203, %204] : memref<8x8xi32, #tpu.memory_space<smem>>
        %c7_i32_165 = arith.constant 7 : i32
        %c0_i32_166 = arith.constant 0 : i32
        %206 = tpu.memref_slice %arg2[%205, %c0_i32_166] : memref<100x128xf32, #tpu.memory_space<any>> -> memref<1x128xf32, #tpu.memory_space<any>>
        %c7_i32_167 = arith.constant 7 : i32
        %c0_i32_168 = arith.constant 0 : i32
        %207 = tpu.memref_slice %arg6[%138, %c7_i32_167, %c0_i32_168] : memref<2x8x128xf32, #tpu.memory_space<vmem>> -> memref<1x1x128xf32, #tpu.memory_space<vmem>>
        %208 = tpu.memref_squeeze %207 : memref<1x1x128xf32, #tpu.memory_space<vmem>> -> memref<1x128xf32, #tpu.memory_space<vmem>>
        %209 = tpu.memref_slice %arg7[%138, %c7_i32_165] : memref<2x8x!tpu.dma_semaphore, #tpu.memory_space<semaphore_mem>> -> memref<1x1x!tpu.dma_semaphore, #tpu.memory_space<semaphore_mem>>
        %210 = tpu.memref_squeeze %209 : memref<1x1x!tpu.dma_semaphore, #tpu.memory_space<semaphore_mem>> -> memref<!tpu.dma_semaphore, #tpu.memory_space<semaphore_mem>>
        tpu.enqueue_dma source(%206 : memref<1x128xf32, #tpu.memory_space<any>>) target(%208 : memref<1x128xf32, #tpu.memory_space<vmem>>) target_semaphore(%210 : memref<!tpu.dma_semaphore, #tpu.memory_space<semaphore_mem>>)
      } else {
      }
      %c0_121 = arith.constant 0 : index
      %c0_122 = arith.constant 0 : index
      %131 = vector.load %arg8[%c0_121, %c0_122] : memref<8x128xf32, #tpu.memory_space<vmem>>, vector<8x128xf32>
      %132 = arith.index_cast %86 : i32 to index
      %c0_123 = arith.constant 0 : index
      %c0_124 = arith.constant 0 : index
      %133 = vector.load %arg6[%132, %c0_123, %c0_124] : memref<2x8x128xf32, #tpu.memory_space<vmem>>, vector<1x8x128xf32>
      %134 = vector.shape_cast %133 : vector<1x8x128xf32> to vector<8x128xf32>
      %135 = arith.maximumf %131, %134 : vector<8x128xf32>
      %c0_125 = arith.constant 0 : index
      %c0_126 = arith.constant 0 : index
      %136 = vector.load %arg8[%c0_125, %c0_126] : memref<8x128xf32, #tpu.memory_space<vmem>>, vector<8x128xf32>
      tpu.vector_store %arg8[%c0_125, %c0_126], %135 {strides = array<i32>} : memref<8x128xf32, #tpu.memory_space<vmem>>, vector<8x128xf32>,
    }
    %c8_i32_60 = arith.constant 8 : i32
    %c0_61 = arith.constant 0 : index
    %c0_62 = arith.constant 0 : index
    %68 = vector.load %arg8[%c0_61, %c0_62] : memref<8x128xf32, #tpu.memory_space<vmem>>, vector<8x128xf32>
    %c0_63 = arith.constant 0 : index
    %c0_64 = arith.constant 0 : index
    %69 = vector.load %arg3[%c0_63, %c0_64] : memref<128x128xf32, #tpu.memory_space<vmem>>, vector<128x128xf32>
    %cst_65 = arith.constant dense<0.000000e+00> : vector<8x128xf32>
    %70 = tpu.matmul %68, %69, %cst_65 {dimension_numbers = #tpu.dot_dimension_numbers<[1], [0], [0], [1], [0, 0, 1, 1], [], []>} : vector<8x128xf32>, vector<128x128xf32>, vector<8x128xf32> -> vector<8x128xf32>
    %c0_66 = arith.constant 0 : index
    %c0_67 = arith.constant 0 : index
    %71 = vector.load %arg4[%c0_66, %c0_67] : memref<1x128xf32, #tpu.memory_space<vmem>>, vector<1x128xf32>
    %72 = vector.broadcast %71 : vector<1x128xf32> to vector<8x128xf32>
    %73 = arith.addf %70, %72 : vector<8x128xf32>
    %c0_68 = arith.constant 0 : index
    %c0_69 = arith.constant 0 : index
    %74 = vector.load %arg5[%c0_68, %c0_69] : memref<8x128xf32, #tpu.memory_space<vmem>>, vector<8x128xf32>
    tpu.vector_store %arg5[%c0_68, %c0_69], %73 {strides = array<i32>} : memref<8x128xf32, #tpu.memory_space<vmem>>, vector<8x128xf32>,
    return
  }
  func.func @transform_1(%arg0: i32, %arg1: memref<8x8xi32, #tpu.memory_space<smem>>) -> (i32, i32) {
    %c0_i32 = arith.constant 0 : i32
    %c0_i32_0 = arith.constant 0 : i32
    %c0_i32_1 = arith.constant 0 : i32
    return %c0_i32, %c0_i32_0 : i32, i32
  }
  func.func @transform_2(%arg0: i32, %arg1: memref<8x8xi32, #tpu.memory_space<smem>>) -> (i32, i32) {
    %c0_i32 = arith.constant 0 : i32
    %c0_i32_0 = arith.constant 0 : i32
    %c0_i32_1 = arith.constant 0 : i32
    return %c0_i32, %c0_i32_0 : i32, i32
  }
  func.func @transform_3(%arg0: i32, %arg1: memref<8x8xi32, #tpu.memory_space<smem>>) -> (i32, i32) {
    %c0_i32 = arith.constant 0 : i32
    %c0_i32_0 = arith.constant 0 : i32
    return %arg0, %c0_i32 : i32, i32
  }
}

</mosaic_0001>

<llo_original>
// kernel: cnn_text_forward.1
$region0: #{cnn_text_forward.1}
  #allocation0 [shape = 'u32[]', space=smem, size = 0x4, offset = 0x4, fixed_abs, tag = 'smem constant byte address 0x4 - core index']
  #allocation1 [shape = 'u32[144,128]{1,0:T(1,128)}', space=vmem, size = 0x12000, scoped, tag = 'internal scratch']
  #allocation2 [shape = 'f32[2,8,128]{2,1,0:T(8,128)}', space=vmem, size = 0x2000, scoped, tag = 'scratch operand']
  #allocation3 [shape = 's32[16]{0}', space=sflag, size = 0x40, scoped, tag = 'scratch operand']
  #allocation4 [shape = 'f32[8,128]{1,0:T(8,128)}', space=vmem, size = 0x1000, scoped, tag = 'scratch operand']
  #allocation5 [shape = 's32[1]{0}', space=sflag, size = 0x4, scoped, tag = 'scoped memory for cnn_text_forward.1']
  #allocation6 [shape = 'u8[4096]{0}', space=smem, size = 0x1000, scoped, tag = 'prefetched SMEM operand 0']
  #allocation9 [shape = 's32[]', space=sflag, size = 0x4, offset = 0, fixed_abs, tag = 'sflag constant byte address 0x0 - dummy sync flag']
  #allocation10 [shape = 's32[]', space=sflag, size = 0x4, offset = 0, fixed_abs, tag = 'sflag constant byte address 0x0 - dummy sync flag']
  #allocation11 [shape = 'u32[]', space=smem, size = 0x4, offset = 0x44, fixed_abs, tag = 'smem constant byte address 0x44 - assertion arg 0']
  #allocation12 [shape = 'u32[]', space=smem, size = 0x4, offset = 0x48, fixed_abs, tag = 'smem constant byte address 0x48 - assertion arg 1']
  #allocation13 [shape = 's32[]', space=sflag, size = 0x4, offset = 0, fixed_abs, tag = 'sflag constant byte address 0x0 - dummy sync flag']
  #allocation14 [shape = 's32[]', space=sflag, size = 0x4, offset = 0, fixed_abs, tag = 'sflag constant byte address 0x0 - dummy sync flag']
  #allocation15 [shape = 's32[]', space=sflag, size = 0x4, offset = 0, fixed_abs, tag = 'sflag constant byte address 0x0 - dummy sync flag']
  #allocation16 [shape = 's32[]', space=sflag, size = 0x4, offset = 0, fixed_abs, tag = 'sflag constant byte address 0x0 - dummy sync flag']
  #allocation17 [shape = 's32[]', space=sflag, size = 0x4, offset = 0, fixed_abs, tag = 'sflag constant byte address 0x0 - dummy sync flag']
  #allocation18 [shape = 's32[]', space=sflag, size = 0x4, offset = 0, fixed_abs, tag = 'sflag constant byte address 0x0 - dummy sync flag']
  #allocation19 [shape = 's32[]', space=sflag, size = 0x4, offset = 0, fixed_abs, tag = 'sflag constant byte address 0x0 - dummy sync flag']
  #allocation20 [shape = 's32[]', space=sflag, size = 0x4, offset = 0, fixed_abs, tag = 'sflag constant byte address 0x0 - dummy sync flag']
  #allocation21 [shape = 's32[]', space=sflag, size = 0x4, offset = 0, fixed_abs, tag = 'sflag constant byte address 0x0 - dummy sync flag']
  #allocation22 [shape = 's32[]', space=sflag, size = 0x4, offset = 0, fixed_abs, tag = 'sflag constant byte address 0x0 - dummy sync flag']
  #allocation23 [shape = 's32[]', space=sflag, size = 0x4, offset = 0, fixed_abs, tag = 'sflag constant byte address 0x0 - dummy sync flag']
  #allocation24 [shape = 's32[]', space=sflag, size = 0x4, offset = 0, fixed_abs, tag = 'sflag constant byte address 0x0 - dummy sync flag']
  #allocation25 [shape = 's32[]', space=sflag, size = 0x4, offset = 0, fixed_abs, tag = 'sflag constant byte address 0x0 - dummy sync flag']
  #allocation26 [shape = 's32[]', space=sflag, size = 0x4, offset = 0, fixed_abs, tag = 'sflag constant byte address 0x0 - dummy sync flag']
  #allocation27 [shape = 's32[]', space=sflag, size = 0x4, offset = 0, fixed_abs, tag = 'sflag constant byte address 0x0 - dummy sync flag']
  #allocation28 [shape = 's32[]', space=sflag, size = 0x4, offset = 0, fixed_abs, tag = 'sflag constant byte address 0x0 - dummy sync flag']
  #allocation29 [shape = 's32[]', space=sflag, size = 0x4, offset = 0, fixed_abs, tag = 'sflag constant byte address 0x0 - dummy sync flag']
  #allocation30 [shape = 's32[]', space=sflag, size = 0x4, offset = 0, fixed_abs, tag = 'sflag constant byte address 0x0 - dummy sync flag']
  #allocation31 [shape = 's32[]', space=sflag, size = 0x4, offset = 0, fixed_abs, tag = 'sflag constant byte address 0x0 - dummy sync flag']
  #allocation32 [shape = 's32[]', space=sflag, size = 0x4, offset = 0, fixed_abs, tag = 'sflag constant byte address 0x0 - dummy sync flag']
  #allocation33 [shape = 's32[]', space=sflag, size = 0x4, offset = 0, fixed_abs, tag = 'sflag constant byte address 0x0 - dummy sync flag']
  #allocation34 [shape = 's32[]', space=sflag, size = 0x4, offset = 0, fixed_abs, tag = 'sflag constant byte address 0x0 - dummy sync flag']
  #allocation35 [shape = 's32[]', space=sflag, size = 0x4, offset = 0, fixed_abs, tag = 'sflag constant byte address 0x0 - dummy sync flag']
  #allocation36 [shape = 's32[]', space=sflag, size = 0x4, offset = 0, fixed_abs, tag = 'sflag constant byte address 0x0 - dummy sync flag']
  #allocation37 [shape = 's32[]', space=sflag, size = 0x4, offset = 0, fixed_abs, tag = 'sflag constant byte address 0x0 - dummy sync flag']
  #allocation38 [shape = 's32[]', space=sflag, size = 0x4, offset = 0, fixed_abs, tag = 'sflag constant byte address 0x0 - dummy sync flag']
  #allocation39 [shape = 's32[]', space=sflag, size = 0x4, offset = 0, fixed_abs, tag = 'sflag constant byte address 0x0 - dummy sync flag']
  #allocation40 [shape = 's32[]', space=sflag, size = 0x4, offset = 0, fixed_abs, tag = 'sflag constant byte address 0x0 - dummy sync flag']
  #allocation41 [shape = 's32[]', space=sflag, size = 0x4, offset = 0, fixed_abs, tag = 'sflag constant byte address 0x0 - dummy sync flag']
  #allocation42 [shape = 's32[]', space=sflag, size = 0x4, offset = 0, fixed_abs, tag = 'sflag constant byte address 0x0 - dummy sync flag']
  %s0 = inlined_call_operand.vmem [shape: s32[8,8], index: 0, kind: input, shape index: {}]
  %s1 = inlined_call_operand.hbm [shape: f32[100,128], index: 1, kind: input, shape index: {}]
  %s2 = inlined_call_operand.hbm [shape: f32[128,128], index: 2, kind: input, shape index: {}]
  %s3 = inlined_call_operand.vmem [shape: f32[1,128], index: 3, kind: input, shape index: {}]
  %s4 = inlined_call_operand.vmem [shape: f32[8,128], index: 4, kind: output, shape index: {}]
  %s5 = sld [smem:[#allocation0]]
  $region97: #{cnn_text_forward.1} parent=0
    _
  %s7 = ssub.s32 1, %s5
  %s8 = scalar_select 0, %s7, %s5
  %s9 = sshll.u32 %s0, 4
  %s10 = int_to_ptr.vmem [resolvable:$true] %s9
  %12 = dma.vmem_to_smem %s10, 128, [#allocation6], [#allocation5]
  %13 = dma.done [#allocation5], 128
  %14 = sfence
  $region1: #{cnn_text_forward.1} parent=0
    #allocation7 [shape = 'u8[65536]{0}', space=vmem, size = 0x10000, scoped, tag = 'input window, operand 2, single buffered']
    #allocation8 [shape = 's32[1]{0}', space=sflag, size = 0x4, scoped, tag = 'scoped memory for cnn_text_forward.1']
    %15 = vsyncpa [#allocation8], 0
    // Predicated region
    $region2: #{cnn_text_forward.1} parent=1 // pred_check
      _
    $region3: #{cnn_text_forward.1} parent=1 // pred_check_branch
      %17 = sbr.rel (0) target = $region5
    $region4: #{cnn_text_forward.1} parent=1 // pred_region
      %s19 = ssub.s32 2048, 2048
      %20 = vsyncadd [#allocation8], %s19
      %s21 = sshll.u32 [#allocation7], 4
      %s22 = int_to_ptr.vmem [resolvable:$true] %s21
      %27 = dma.hbm_to_vmem [thread:$0]  %s2, 2048, %s22, [#allocation8], 128, 128, 8
    $region5: #{cnn_text_forward.1} parent=1 // pred_fallthru
      _
    // Predicated region
    $region6: #{cnn_text_forward.1} parent=1 // pred_check
      _
    $region7: #{cnn_text_forward.1} parent=1 // pred_check_branch
      %29 = sbr.rel (0) target = $region9
    $region8: #{cnn_text_forward.1} parent=1 // pred_region
      _
    $region9: #{cnn_text_forward.1} parent=1 // pred_fallthru
      _
    // Predicated region
    $region10: #{cnn_text_forward.1} parent=1 // pred_check
      _
    $region11: #{cnn_text_forward.1} parent=1 // pred_check_branch
      %31 = sbr.rel (0) target = $region13
    $region12: #{cnn_text_forward.1} parent=1 // pred_region
      %32 = dma.done [#allocation8], 2048
    $region13: #{cnn_text_forward.1} parent=1 // pred_fallthru
      _
    %s33 = smul.u32 0, 8
    %34 = vst [vmem:[#allocation4] sm:$0xff] -inf
    %s35 = smul.u32 %s33, 128
    %s36 = sld [smem:[#allocation6 + %s35]]
    %s37 = smul.addr %s36, 16
    %s38 = scalar_lea.hbm %s1, %s37
    // Predicated region
    $region14: #{cnn_text_forward.1} parent=1 // pred_check
      _
    $region15: #{cnn_text_forward.1} parent=1 // pred_check_branch
      %40 = sbr.rel target = $region17
    $region16: #{cnn_text_forward.1} parent=1 // pred_region
      %41 = sst [smem:[#allocation11]] [#allocation10]
      %42 = sst [smem:[#allocation12]] [#allocation9]
    $region17: #{cnn_text_forward.1} parent=1 // pred_fallthru
      _
    %44 = shalt.err (0)
    %s46 = sshll.u32 [#allocation2], 4
    %s47 = int_to_ptr.vmem [resolvable:$true] %s46
    %49 = dma.hbm_to_vmem [thread:$0]  %s38, 16, %s47, [#allocation3]
    %s50 = sadd.s32 %s33, 1
    %s51 = smul.u32 %s50, 128
    %s52 = sld [smem:[#allocation6 + %s51]]
    %s53 = smul.addr %s52, 16
    %s54 = scalar_lea.hbm %s1, %s53
    %s55 = scalar_lea.vmem [#allocation2], 1
    %s56 = scalar_lea.sflag [#allocation3], 1
    // Predicated region
    $region18: #{cnn_text_forward.1} parent=1 // pred_check
      _
    $region19: #{cnn_text_forward.1} parent=1 // pred_check_branch
      %58 = sbr.rel target = $region21
    $region20: #{cnn_text_forward.1} parent=1 // pred_region
      %59 = sst [smem:[#allocation11]] [#allocation14]
      %60 = sst [smem:[#allocation12]] [#allocation13]
    $region21: #{cnn_text_forward.1} parent=1 // pred_fallthru
      _
    %62 = shalt.err (0)
    %s64 = sshll.u32 %s55, 4
    %s65 = int_to_ptr.vmem [resolvable:$true] %s64
    %67 = dma.hbm_to_vmem [thread:$0]  %s54, 16, %s65, %s56
    %s68 = sadd.s32 %s33, 2
    %s69 = smul.u32 %s68, 128
    %s70 = sld [smem:[#allocation6 + %s69]]
    %s71 = smul.addr %s70, 16
    %s72 = scalar_lea.hbm %s1, %s71
    %s73 = scalar_lea.vmem [#allocation2], 2
    %s74 = scalar_lea.sflag [#allocation3], 2
    // Predicated region
    $region22: #{cnn_text_forward.1} parent=1 // pred_check
      _
    $region23: #{cnn_text_forward.1} parent=1 // pred_check_branch
      %76 = sbr.rel target = $region25
    $region24: #{cnn_text_forward.1} parent=1 // pred_region
      %77 = sst [smem:[#allocation11]] [#allocation16]
      %78 = sst [smem:[#allocation12]] [#allocation15]
    $region25: #{cnn_text_forward.1} parent=1 // pred_fallthru
      _
    %80 = shalt.err (0)
    %s82 = sshll.u32 %s73, 4
    %s83 = int_to_ptr.vmem [resolvable:$true] %s82
    %85 = dma.hbm_to_vmem [thread:$0]  %s72, 16, %s83, %s74
    %s86 = sadd.s32 %s33, 3
    %s87 = smul.u32 %s86, 128
    %s88 = sld [smem:[#allocation6 + %s87]]
    %s89 = smul.addr %s88, 16
    %s90 = scalar_lea.hbm %s1, %s89
    %s91 = scalar_lea.vmem [#allocation2], 3
    %s92 = scalar_lea.sflag [#allocation3], 3
    // Predicated region
    $region26: #{cnn_text_forward.1} parent=1 // pred_check
      _
    $region27: #{cnn_text_forward.1} parent=1 // pred_check_branch
      %94 = sbr.rel target = $region29
    $region28: #{cnn_text_forward.1} parent=1 // pred_region
      %95 = sst [smem:[#allocation11]] [#allocation18]
      %96 = sst [smem:[#allocation12]] [#allocation17]
    $region29: #{cnn_text_forward.1} parent=1 // pred_fallthru
      _
    %98 = shalt.err (0)
    %s100 = sshll.u32 %s91, 4
    %s101 = int_to_ptr.vmem [resolvable:$true] %s100
    %103 = dma.hbm_to_vmem [thread:$0]  %s90, 16, %s101, %s92
    %s104 = sadd.s32 %s33, 4
    %s105 = smul.u32 %s104, 128
    %s106 = sld [smem:[#allocation6 + %s105]]
    %s107 = smul.addr %s106, 16
    %s108 = scalar_lea.hbm %s1, %s107
    %s109 = scalar_lea.vmem [#allocation2], 4
    %s110 = scalar_lea.sflag [#allocation3], 4
    // Predicated region
    $region30: #{cnn_text_forward.1} parent=1 // pred_check
      _
    $region31: #{cnn_text_forward.1} parent=1 // pred_check_branch
      %112 = sbr.rel target = $region33
    $region32: #{cnn_text_forward.1} parent=1 // pred_region
      %113 = sst [smem:[#allocation11]] [#allocation20]
      %114 = sst [smem:[#allocation12]] [#allocation19]
    $region33: #{cnn_text_forward.1} parent=1 // pred_fallthru
      _
    %116 = shalt.err (0)
    %s118 = sshll.u32 %s109, 4
    %s119 = int_to_ptr.vmem [resolvable:$true] %s118
    %121 = dma.hbm_to_vmem [thread:$0]  %s108, 16, %s119, %s110
    %s122 = sadd.s32 %s33, 5
    %s123 = smul.u32 %s122, 128
    %s124 = sld [smem:[#allocation6 + %s123]]
    %s125 = smul.addr %s124, 16
    %s126 = scalar_lea.hbm %s1, %s125
    %s127 = scalar_lea.vmem [#allocation2], 5
    %s128 = scalar_lea.sflag [#allocation3], 5
    // Predicated region
    $region34: #{cnn_text_forward.1} parent=1 // pred_check
      _
    $region35: #{cnn_text_forward.1} parent=1 // pred_check_branch
      %130 = sbr.rel target = $region37
    $region36: #{cnn_text_forward.1} parent=1 // pred_region
      %131 = sst [smem:[#allocation11]] [#allocation22]
      %132 = sst [smem:[#allocation12]] [#allocation21]
    $region37: #{cnn_text_forward.1} parent=1 // pred_fallthru
      _
    %134 = shalt.err (0)
    %s136 = sshll.u32 %s127, 4
    %s137 = int_to_ptr.vmem [resolvable:$true] %s136
    %139 = dma.hbm_to_vmem [thread:$0]  %s126, 16, %s137, %s128
    %s140 = sadd.s32 %s33, 6
    %s141 = smul.u32 %s140, 128
    %s142 = sld [smem:[#allocation6 + %s141]]
    %s143 = smul.addr %s142, 16
    %s144 = scalar_lea.hbm %s1, %s143
    %s145 = scalar_lea.vmem [#allocation2], 6
    %s146 = scalar_lea.sflag [#allocation3], 6
    // Predicated region
    $region38: #{cnn_text_forward.1} parent=1 // pred_check
      _
    $region39: #{cnn_text_forward.1} parent=1 // pred_check_branch
      %148 = sbr.rel target = $region41
    $region40: #{cnn_text_forward.1} parent=1 // pred_region
      %149 = sst [smem:[#allocation11]] [#allocation24]
      %150 = sst [smem:[#allocation12]] [#allocation23]
    $region41: #{cnn_text_forward.1} parent=1 // pred_fallthru
      _
    %152 = shalt.err (0)
    %s154 = sshll.u32 %s145, 4
    %s155 = int_to_ptr.vmem [resolvable:$true] %s154
    %157 = dma.hbm_to_vmem [thread:$0]  %s144, 16, %s155, %s146
    %s158 = sadd.s32 %s33, 7
    %s159 = smul.u32 %s158, 128
    %s160 = sld [smem:[#allocation6 + %s159]]
    %s161 = smul.addr %s160, 16
    %s162 = scalar_lea.hbm %s1, %s161
    %s163 = scalar_lea.vmem [#allocation2], 7
    %s164 = scalar_lea.sflag [#allocation3], 7
    // Predicated region
    $region42: #{cnn_text_forward.1} parent=1 // pred_check
      _
    $region43: #{cnn_text_forward.1} parent=1 // pred_check_branch
      %166 = sbr.rel target = $region45
    $region44: #{cnn_text_forward.1} parent=1 // pred_region
      %167 = sst [smem:[#allocation11]] [#allocation26]
      %168 = sst [smem:[#allocation12]] [#allocation25]
    $region45: #{cnn_text_forward.1} parent=1 // pred_fallthru
      _
    %170 = shalt.err (0)
    %s172 = sshll.u32 %s163, 4
    %s173 = int_to_ptr.vmem [resolvable:$true] %s172
    %175 = dma.hbm_to_vmem [thread:$0]  %s162, 16, %s173, %s164
    loop: start=0, step=1, limit=8
    $region46: #{cnn_text_forward.1} parent=1 // loop_pre_header
      _
    $region47: #{cnn_text_forward.1} parent=1 // loop_header
      %s177 = sphi 0, %s181
      %p178 = scmp.ge.s32.totalorder %s177, 8
    $region48: #{cnn_text_forward.1} parent=1 // loop_header_branch
      %180 = sbr.rel (%p178) target = $region52
    $region49: #{cnn_text_forward.1} parent=1 // loop_body
      %p182 = scmp.lt.s32.totalorder %s177, 0
      %s183 = ssub.s32 0, %s177
      %s184 = scalar_select %p182, %s183, %s177
      %s185 = sand.u32 %s184, 1
      %s186 = ssub.s32 0, %s185
      %s187 = scalar_select %p182, %s186, %s185
      %p188 = scmp.ne.s32.totalorder %s187, 0
      %p189 = scmp.lt.s32.totalorder %s187, 0
      %p190 = pnand %p189, %p188
      %p191 = pneg %p190
      %s192 = sadd.s32 %s187, 2
      %s193 = scalar_select %p191, %s192, %s187
      %s194 = smul.u32 %s193, 8
      %s195 = scalar_lea.sflag [#allocation3], %s194
      %s196 = smul.u32 1, 1
      %s197 = sshll.u32 %s196, 4
      %198 = dma.done %s195, %s197
      %s199 = sadd.s32 1, %s194
      %s200 = scalar_lea.sflag [#allocation3], %s199
      %s201 = sshll.u32 %s196, 4
      %202 = dma.done %s200, %s201
      %s203 = sadd.s32 2, %s194
      %s204 = scalar_lea.sflag [#allocation3], %s203
      %s205 = sshll.u32 %s196, 4
      %206 = dma.done %s204, %s205
      %s207 = sadd.s32 3, %s194
      %s208 = scalar_lea.sflag [#allocation3], %s207
      %s209 = sshll.u32 %s196, 4
      %210 = dma.done %s208, %s209
      %s211 = sadd.s32 4, %s194
      %s212 = scalar_lea.sflag [#allocation3], %s211
      %s213 = sshll.u32 %s196, 4
      %214 = dma.done %s212, %s213
      %s215 = sadd.s32 5, %s194
      %s216 = scalar_lea.sflag [#allocation3], %s215
      %s217 = sshll.u32 %s196, 4
      %218 = dma.done %s216, %s217
      %s219 = sadd.s32 6, %s194
      %s220 = scalar_lea.sflag [#allocation3], %s219
      %s221 = sshll.u32 %s196, 4
      %222 = dma.done %s220, %s221
      %s223 = sadd.s32 7, %s194
      %s224 = scalar_lea.sflag [#allocation3], %s223
      %s225 = sshll.u32 %s196, 4
      %226 = dma.done %s224, %s225
      %s227 = sadd.s32 %s177, 1
      %p228 = scmp.lt.s32.totalorder %s227, 8
      // Predicated region
      $region53: #{cnn_text_forward.1} parent=49 // pred_check
        %p229 = pneg %p228
      $region54: #{cnn_text_forward.1} parent=49 // pred_check_branch
        %231 = sbr.rel (%p229) target = $region56
      $region55: #{cnn_text_forward.1} parent=49 // pred_region
        %s232 = ssub.s32 1, %s193
        %s233 = sshra.s32 %s227, 7
        %s234 = sand.u32 %s227, 127
        %s235 = sadd.s32 %s233, %s33
        %s236 = smul.u32 %s235, 128
        %s237 = sshra.s32 %s227, 7
        %s238 = sand.u32 %s227, 127
        %s239 = sadd.s32 %s236, %s238
        %s240 = sld [smem:[#allocation6 + %s239]]
        %s241 = smul.addr %s240, 16
        %s242 = scalar_lea.hbm %s1, %s241
        %s243 = smul.u32 %s232, 8
        %s244 = scalar_lea.vmem [#allocation2], %s243
        %s245 = scalar_lea.sflag [#allocation3], %s243
        // Predicated region
        $region57: #{cnn_text_forward.1} parent=55 // pred_check
          _
        $region58: #{cnn_text_forward.1} parent=55 // pred_check_branch
          %247 = sbr.rel target = $region60
        $region59: #{cnn_text_forward.1} parent=55 // pred_region
          %248 = sst [smem:[#allocation11]] [#allocation28]
          %249 = sst [smem:[#allocation12]] [#allocation27]
        $region60: #{cnn_text_forward.1} parent=55 // pred_fallthru
          _
        %251 = shalt.err (0)
        %s253 = sshll.u32 %s244, 4
        %s254 = int_to_ptr.vmem [resolvable:$true] %s253
        %256 = dma.hbm_to_vmem [thread:$0]  %s242, 16, %s254, %s245
        %s257 = sadd.s32 %s233, %s50
        %s258 = smul.u32 %s257, 128
        %s259 = sadd.s32 %s258, %s238
        %s260 = sld [smem:[#allocation6 + %s259]]
        %s261 = smul.addr %s260, 16
        %s262 = scalar_lea.hbm %s1, %s261
        %s263 = sadd.s32 1, %s243
        %s264 = scalar_lea.vmem [#allocation2], %s263
        %s265 = scalar_lea.sflag [#allocation3], %s263
        // Predicated region
        $region61: #{cnn_text_forward.1} parent=55 // pred_check
          _
        $region62: #{cnn_text_forward.1} parent=55 // pred_check_branch
          %267 = sbr.rel target = $region64
        $region63: #{cnn_text_forward.1} parent=55 // pred_region
          %268 = sst [smem:[#allocation11]] [#allocation30]
          %269 = sst [smem:[#allocation12]] [#allocation29]
        $region64: #{cnn_text_forward.1} parent=55 // pred_fallthru
          _
        %271 = shalt.err (0)
        %s273 = sshll.u32 %s264, 4
        %s274 = int_to_ptr.vmem [resolvable:$true] %s273
        %276 = dma.hbm_to_vmem [thread:$0]  %s262, 16, %s274, %s265
        %s277 = sadd.s32 %s233, %s68
        %s278 = smul.u32 %s277, 128
        %s279 = sadd.s32 %s278, %s238
        %s280 = sld [smem:[#allocation6 + %s279]]
        %s281 = smul.addr %s280, 16
        %s282 = scalar_lea.hbm %s1, %s281
        %s283 = sadd.s32 2, %s243
        %s284 = scalar_lea.vmem [#allocation2], %s283
        %s285 = scalar_lea.sflag [#allocation3], %s283
        // Predicated region
        $region65: #{cnn_text_forward.1} parent=55 // pred_check
          _
        $region66: #{cnn_text_forward.1} parent=55 // pred_check_branch
          %287 = sbr.rel target = $region68
        $region67: #{cnn_text_forward.1} parent=55 // pred_region
          %288 = sst [smem:[#allocation11]] [#allocation32]
          %289 = sst [smem:[#allocation12]] [#allocation31]
        $region68: #{cnn_text_forward.1} parent=55 // pred_fallthru
          _
        %291 = shalt.err (0)
        %s293 = sshll.u32 %s284, 4
        %s294 = int_to_ptr.vmem [resolvable:$true] %s293
        %296 = dma.hbm_to_vmem [thread:$0]  %s282, 16, %s294, %s285
        %s297 = sadd.s32 %s233, %s86
        %s298 = smul.u32 %s297, 128
        %s299 = sadd.s32 %s298, %s238
        %s300 = sld [smem:[#allocation6 + %s299]]
        %s301 = smul.addr %s300, 16
        %s302 = scalar_lea.hbm %s1, %s301
        %s303 = sadd.s32 3, %s243
        %s304 = scalar_lea.vmem [#allocation2], %s303
        %s305 = scalar_lea.sflag [#allocation3], %s303
        // Predicated region
        $region69: #{cnn_text_forward.1} parent=55 // pred_check
          _
        $region70: #{cnn_text_forward.1} parent=55 // pred_check_branch
          %307 = sbr.rel target = $region72
        $region71: #{cnn_text_forward.1} parent=55 // pred_region
          %308 = sst [smem:[#allocation11]] [#allocation34]
          %309 = sst [smem:[#allocation12]] [#allocation33]
        $region72: #{cnn_text_forward.1} parent=55 // pred_fallthru
          _
        %311 = shalt.err (0)
        %s313 = sshll.u32 %s304, 4
        %s314 = int_to_ptr.vmem [resolvable:$true] %s313
        %316 = dma.hbm_to_vmem [thread:$0]  %s302, 16, %s314, %s305
        %s317 = sadd.s32 %s233, %s104
        %s318 = smul.u32 %s317, 128
        %s319 = sadd.s32 %s318, %s238
        %s320 = sld [smem:[#allocation6 + %s319]]
        %s321 = smul.addr %s320, 16
        %s322 = scalar_lea.hbm %s1, %s321
        %s323 = sadd.s32 4, %s243
        %s324 = scalar_lea.vmem [#allocation2], %s323
        %s325 = scalar_lea.sflag [#allocation3], %s323
        // Predicated region
        $region73: #{cnn_text_forward.1} parent=55 // pred_check
          _
        $region74: #{cnn_text_forward.1} parent=55 // pred_check_branch
          %327 = sbr.rel target = $region76
        $region75: #{cnn_text_forward.1} parent=55 // pred_region
          %328 = sst [smem:[#allocation11]] [#allocation36]
          %329 = sst [smem:[#allocation12]] [#allocation35]
        $region76: #{cnn_text_forward.1} parent=55 // pred_fallthru
          _
        %331 = shalt.err (0)
        %s333 = sshll.u32 %s324, 4
        %s334 = int_to_ptr.vmem [resolvable:$true] %s333
        %336 = dma.hbm_to_vmem [thread:$0]  %s322, 16, %s334, %s325
        %s337 = sadd.s32 %s233, %s122
        %s338 = smul.u32 %s337, 128
        %s339 = sadd.s32 %s338, %s238
        %s340 = sld [smem:[#allocation6 + %s339]]
        %s341 = smul.addr %s340, 16
        %s342 = scalar_lea.hbm %s1, %s341
        %s343 = sadd.s32 5, %s243
        %s344 = scalar_lea.vmem [#allocation2], %s343
        %s345 = scalar_lea.sflag [#allocation3], %s343
        // Predicated region
        $region77: #{cnn_text_forward.1} parent=55 // pred_check
          _
        $region78: #{cnn_text_forward.1} parent=55 // pred_check_branch
          %347 = sbr.rel target = $region80
        $region79: #{cnn_text_forward.1} parent=55 // pred_region
          %348 = sst [smem:[#allocation11]] [#allocation38]
          %349 = sst [smem:[#allocation12]] [#allocation37]
        $region80: #{cnn_text_forward.1} parent=55 // pred_fallthru
          _
        %351 = shalt.err (0)
        %s353 = sshll.u32 %s344, 4
        %s354 = int_to_ptr.vmem [resolvable:$true] %s353
        %356 = dma.hbm_to_vmem [thread:$0]  %s342, 16, %s354, %s345
        %s357 = sadd.s32 %s233, %s140
        %s358 = smul.u32 %s357, 128
        %s359 = sadd.s32 %s358, %s238
        %s360 = sld [smem:[#allocation6 + %s359]]
        %s361 = smul.addr %s360, 16
        %s362 = scalar_lea.hbm %s1, %s361
        %s363 = sadd.s32 6, %s243
        %s364 = scalar_lea.vmem [#allocation2], %s363
        %s365 = scalar_lea.sflag [#allocation3], %s363
        // Predicated region
        $region81: #{cnn_text_forward.1} parent=55 // pred_check
          _
        $region82: #{cnn_text_forward.1} parent=55 // pred_check_branch
          %367 = sbr.rel target = $region84
        $region83: #{cnn_text_forward.1} parent=55 // pred_region
          %368 = sst [smem:[#allocation11]] [#allocation40]
          %369 = sst [smem:[#allocation12]] [#allocation39]
        $region84: #{cnn_text_forward.1} parent=55 // pred_fallthru
          _
        %371 = shalt.err (0)
        %s373 = sshll.u32 %s364, 4
        %s374 = int_to_ptr.vmem [resolvable:$true] %s373
        %376 = dma.hbm_to_vmem [thread:$0]  %s362, 16, %s374, %s365
        %s377 = sadd.s32 %s233, %s158
        %s378 = smul.u32 %s377, 128
        %s379 = sadd.s32 %s378, %s238
        %s380 = sld [smem:[#allocation6 + %s379]]
        %s381 = smul.addr %s380, 16
        %s382 = scalar_lea.hbm %s1, %s381
        %s383 = sadd.s32 7, %s243
        %s384 = scalar_lea.vmem [#allocation2], %s383
        %s385 = scalar_lea.sflag [#allocation3], %s383
        // Predicated region
        $region85: #{cnn_text_forward.1} parent=55 // pred_check
          _
        $region86: #{cnn_text_forward.1} parent=55 // pred_check_branch
          %387 = sbr.rel target = $region88
        $region87: #{cnn_text_forward.1} parent=55 // pred_region
          %388 = sst [smem:[#allocation11]] [#allocation42]
          %389 = sst [smem:[#allocation12]] [#allocation41]
        $region88: #{cnn_text_forward.1} parent=55 // pred_fallthru
          _
        %391 = shalt.err (0)
        %s393 = sshll.u32 %s384, 4
        %s394 = int_to_ptr.vmem [resolvable:$true] %s393
        %396 = dma.hbm_to_vmem [thread:$0]  %s382, 16, %s394, %s385
      $region56: #{cnn_text_forward.1} parent=49 // pred_fallthru
        _
      %v397 = vld [vmem:[#allocation4] sm:$0xff]
      %s398 = scalar_lea.vmem [#allocation2], %s194
      %v399 = vld [vmem:[%s398] sm:$0xff]
      %v400 = vmax.f32 %v397, %v399
      %401 = vst [vmem:[#allocation4] sm:$0xff] %v400
    $region50: #{cnn_text_forward.1} parent=1 // loop_footer
      %s181 = sadd.s32 1, %s177
    $region51: #{cnn_text_forward.1} parent=1 // loop_footer_branch
      %176 = sbr.rel target = $region47
    $region52: #{cnn_text_forward.1} parent=1 // loop_exit
      _
    %v402 = vld [vmem:[#allocation4] sm:$0xff]
    %v403 = vld [vmem:[#allocation7] sm:$0xff]
    %v404 = vld [vmem:[#allocation7 + $0x8] sm:$0xff]
    %v405 = vld [vmem:[#allocation7 + $0x10] sm:$0xff]
    %v406 = vld [vmem:[#allocation7 + $0x18] sm:$0xff]
    %v407 = vld [vmem:[#allocation7 + $0x20] sm:$0xff]
    %v408 = vld [vmem:[#allocation7 + $0x28] sm:$0xff]
    %v409 = vld [vmem:[#allocation7 + $0x30] sm:$0xff]
    %v410 = vld [vmem:[#allocation7 + $0x38] sm:$0xff]
    %v411 = vld [vmem:[#allocation7 + $0x40] sm:$0xff]
    %v412 = vld [vmem:[#allocation7 + $0x48] sm:$0xff]
    %v413 = vld [vmem:[#allocation7 + $0x50] sm:$0xff]
    %v414 = vld [vmem:[#allocation7 + $0x58] sm:$0xff]
    %v415 = vld [vmem:[#allocation7 + $0x60] sm:$0xff]
    %v416 = vld [vmem:[#allocation7 + $0x68] sm:$0xff]
    %v417 = vld [vmem:[#allocation7 + $0x70] sm:$0xff]
    %v418 = vld [vmem:[#allocation7 + $0x78] sm:$0xff]
    %v419 = vld [vmem:[%s3] sm:$0x1]
    %v421 = vlaneseq
    %v422 = vshrl.u32 %v421, 7
    %v423 = vsub.s32 0, %v422
    %v424 = vrot.slane %v419, %v423
    %426 = vmatprep.subr.mxu0 0.0
    %427 = vmatpush1.msra.mxu0 %v403
    %428 = vmatprep.subr.mxu0 0.0
    %429 = vmatpush1.msra.mxu0 %v404
    %430 = vmatprep.subr.mxu0 0.0
    %431 = vmatpush1.msra.mxu0 %v405
    %432 = vmatprep.subr.mxu0 0.0
    %433 = vmatpush1.msra.mxu0 %v406
    %434 = vmatprep.subr.mxu0 0.0
    %435 = vmatpush1.msra.mxu0 %v407
    %436 = vmatprep.subr.mxu0 0.0
    %437 = vmatpush1.msra.mxu0 %v408
    %438 = vmatprep.subr.mxu0 0.0
    %439 = vmatpush1.msra.mxu0 %v409
    %440 = vmatprep.subr.mxu0 0.0
    %441 = vmatpush1.msra.mxu0 %v410
    %442 = vmatprep.subr.mxu0 0.0
    %443 = vmatpush1.msra.mxu0 %v411
    %444 = vmatprep.subr.mxu0 0.0
    %445 = vmatpush1.msra.mxu0 %v412
    %446 = vmatprep.subr.mxu0 0.0
    %447 = vmatpush1.msra.mxu0 %v413
    %448 = vmatprep.subr.mxu0 0.0
    %449 = vmatpush1.msra.mxu0 %v414
    %450 = vmatprep.subr.mxu0 0.0
    %451 = vmatpush1.msra.mxu0 %v415
    %452 = vmatprep.subr.mxu0 0.0
    %453 = vmatpush1.msra.mxu0 %v416
    %454 = vmatprep.subr.mxu0 0.0
    %455 = vmatpush1.msra.mxu0 %v417
    %456 = vmatprep.subr.mxu0 0.0
    %457 = vmatpush1.msra.mxu0 %v418
    %458 = vmatprep.subr.mxu0 0.0
    %459 = vmatpush1.msra.mxu0 0.0
    %460 = vmatprep.subr.mxu0 0.0
    %461 = vmatpush1.msra.mxu0 0.0
    %462 = vmatprep.subr.mxu0 0.0
    %463 = vmatpush1.msra.mxu0 0.0
    %464 = vmatprep.subr.mxu0 0.0
    %465 = vmatpush1.msra.mxu0 0.0
    %466 = vmatprep.subr.mxu0 0.0
    %467 = vmatpush1.msra.mxu0 0.0
    %468 = vmatprep.subr.mxu0 0.0
    %469 = vmatpush1.msra.mxu0 0.0
    %470 = vmatprep.subr.mxu0 0.0
    %471 = vmatpush1.msra.mxu0 0.0
    %472 = vmatprep.subr.mxu0 0.0
    %473 = vmatpush1.msra.mxu0 0.0
    %474 = vmatprep.subr.mxu0 0.0
    %475 = vmatpush1.msra.mxu0 0.0
    %476 = vmatprep.subr.mxu0 0.0
    %477 = vmatpush1.msra.mxu0 0.0
    %478 = vmatprep.subr.mxu0 0.0
    %479 = vmatpush1.msra.mxu0 0.0
    %480 = vmatprep.subr.mxu0 0.0
    %481 = vmatpush1.msra.mxu0 0.0
    %482 = vmatprep.subr.mxu0 0.0
    %483 = vmatpush1.msra.mxu0 0.0
    %484 = vmatprep.subr.mxu0 0.0
    %485 = vmatpush1.msra.mxu0 0.0
    %486 = vmatprep.subr.mxu0 0.0
    %487 = vmatpush1.msra.mxu0 0.0
    %488 = vmatprep.subr.mxu0 0.0
    %489 = vmatpush1.msra.mxu0 0.0
    %490 = vmatprep.mubr.f32.mxu0 0.0
    %491 = vmatmul.mubr.f32.gmra.mrb[0].mxu0 %v402
    %v492 = vpop.f32.mrb[0].mxu0
    %v493 = vadd.f32 %v424, %v492
    %v494 = vpop.f32.mrb[0].mxu0
    %495 = vdwg.mxu0
    %496 = vst [vmem:[%s4] sm:$0xff] %v493
    // Predicated region
    $region89: #{cnn_text_forward.1} parent=1 // pred_check
      _
    $region90: #{cnn_text_forward.1} parent=1 // pred_check_branch
      %498 = sbr.rel (0) target = $region92
    $region91: #{cnn_text_forward.1} parent=1 // pred_region
      _
    $region92: #{cnn_text_forward.1} parent=1 // pred_fallthru
      _
    // Predicated region
    $region93: #{cnn_text_forward.1} parent=1 // pred_check
      _
    $region94: #{cnn_text_forward.1} parent=1 // pred_check_branch
      %500 = sbr.rel (0) target = $region96
    $region95: #{cnn_text_forward.1} parent=1 // pred_region
      _
    $region96: #{cnn_text_forward.1} parent=1 // pred_fallthru
      _
    %501 = vsyncpa [#allocation8], 1
  %502 = vsyncmov [#allocation3]
  %s503 = vpop.sfrf %502
  %p504 = scmp.eq.s32.totalorder %s503, 0
  %p505 = pneg %p504
  %507 = shalt.err (%p505)
  %s508 = scalar_lea.sflag [#allocation3], 1
  %509 = vsyncmov %s508
  %s510 = vpop.sfrf %509
  %p511 = scmp.eq.s32.totalorder %s510, 0
  %p512 = pneg %p511
  %514 = shalt.err (%p512)
  %s515 = scalar_lea.sflag [#allocation3], 2
  %516 = vsyncmov %s515
  %s517 = vpop.sfrf %516
  %p518 = scmp.eq.s32.totalorder %s517, 0
  %p519 = pneg %p518
  %521 = shalt.err (%p519)
  %s522 = scalar_lea.sflag [#allocation3], 3
  %523 = vsyncmov %s522
  %s524 = vpop.sfrf %523
  %p525 = scmp.eq.s32.totalorder %s524, 0
  %p526 = pneg %p525
  %528 = shalt.err (%p526)
  %s529 = scalar_lea.sflag [#allocation3], 4
  %530 = vsyncmov %s529
  %s531 = vpop.sfrf %530
  %p532 = scmp.eq.s32.totalorder %s531, 0
  %p533 = pneg %p532
  %535 = shalt.err (%p533)
  %s536 = scalar_lea.sflag [#allocation3], 5
  %537 = vsyncmov %s536
  %s538 = vpop.sfrf %537
  %p539 = scmp.eq.s32.totalorder %s538, 0
  %p540 = pneg %p539
  %542 = shalt.err (%p540)
  %s543 = scalar_lea.sflag [#allocation3], 6
  %544 = vsyncmov %s543
  %s545 = vpop.sfrf %544
  %p546 = scmp.eq.s32.totalorder %s545, 0
  %p547 = pneg %p546
  %549 = shalt.err (%p547)
  %s550 = scalar_lea.sflag [#allocation3], 7
  %551 = vsyncmov %s550
  %s552 = vpop.sfrf %551
  %p553 = scmp.eq.s32.totalorder %s552, 0
  %p554 = pneg %p553
  %556 = shalt.err (%p554)
  %s557 = scalar_lea.sflag [#allocation3], 8
  %558 = vsyncmov %s557
  %s559 = vpop.sfrf %558
  %p560 = scmp.eq.s32.totalorder %s559, 0
  %p561 = pneg %p560
  %563 = shalt.err (%p561)
  %s564 = scalar_lea.sflag [#allocation3], 9
  %565 = vsyncmov %s564
  %s566 = vpop.sfrf %565
  %p567 = scmp.eq.s32.totalorder %s566, 0
  %p568 = pneg %p567
  %570 = shalt.err (%p568)
  %s571 = scalar_lea.sflag [#allocation3], 10
  %572 = vsyncmov %s571
  %s573 = vpop.sfrf %572
  %p574 = scmp.eq.s32.totalorder %s573, 0
  %p575 = pneg %p574
  %577 = shalt.err (%p575)
  %s578 = scalar_lea.sflag [#allocation3], 11
  %579 = vsyncmov %s578
  %s580 = vpop.sfrf %579
  %p581 = scmp.eq.s32.totalorder %s580, 0
  %p582 = pneg %p581
  %584 = shalt.err (%p582)
  %s585 = scalar_lea.sflag [#allocation3], 12
  %586 = vsyncmov %s585
  %s587 = vpop.sfrf %586
  %p588 = scmp.eq.s32.totalorder %s587, 0
  %p589 = pneg %p588
  %591 = shalt.err (%p589)
  %s592 = scalar_lea.sflag [#allocation3], 13
  %593 = vsyncmov %s592
  %s594 = vpop.sfrf %593
  %p595 = scmp.eq.s32.totalorder %s594, 0
  %p596 = pneg %p595
  %598 = shalt.err (%p596)
  %s599 = scalar_lea.sflag [#allocation3], 14
  %600 = vsyncmov %s599
  %s601 = vpop.sfrf %600
  %p602 = scmp.eq.s32.totalorder %s601, 0
  %p603 = pneg %p602
  %605 = shalt.err (%p603)
  %s606 = scalar_lea.sflag [#allocation3], 15
  %607 = vsyncmov %s606
  %s608 = vpop.sfrf %607
  %p609 = scmp.eq.s32.totalorder %s608, 0
  %p610 = pneg %p609
  %612 = shalt.err (%p610)

</llo_original>
